<compile_context>
chip_gen: v7x
topology: tpu7x:2x2x1
jax: 0.10.0
libtpu: 0.0.40
codegen_flags: <defaults>
</compile_context>

<pallas_src>
import math
from functools import lru_cache, partial

import jax
import jax.numpy as jnp
from jax import lax
from jax.experimental import pallas as pl
from jax.experimental.pallas import tpu as pltpu

# HBM / MXU operand dtype for activations and matmul weights.  bf16 halves
# HBM+VMEM traffic and runs the MXU at bf16 peak on v5e/v6e/v7x; accumulation
# (preferred_element_type) and all LayerNorm / softmax / GELU math stays f32.
# Set to jnp.float32 for bit-closer parity with the f32 PyTorch reference.
ACT_DTYPE = jnp.bfloat16
LN_EPS = 1e-5


# ------------------------------ helpers ------------------------------------- #

def _ln_hat(x):
    mu = jnp.mean(x, axis=-1, keepdims=True)
    var = jnp.mean(jnp.square(x - mu), axis=-1, keepdims=True)
    return (x - mu) * lax.rsqrt(var + LN_EPS)


def _ln(x, g, b):
    return _ln_hat(x) * g + b


@lru_cache(maxsize=None)
def _vmem_limit_bytes():
    """Generation-aware scoped-VMEM limit (v7x: 64 MiB/TC, v5e/v6e: 128 MiB)."""
    try:
        cap = pltpu.get_tpu_info().vmem_capacity_bytes
    except Exception:
        cap = 64 * 1024 * 1024              # conservative if the query is unavailable
    return (40 if cap <= 64 * 1024 * 1024 else 96) * 1024 * 1024


def _probe_kernel(x_ref, o_ref):
    o_ref[...] = x_ref[...] + 1.0


@lru_cache(maxsize=None)
def _buffered_supported():
    """True if this jax accepts pipeline_mode=pl.Buffered(1) on pallas_call specs.

    Constant-index weight blocks are never re-fetched after step 0, so single
    buffering halves their VMEM footprint (matters for fitting on v7x)."""
    if not hasattr(pl, "Buffered"):
        return False
    try:
        fn = pl.pallas_call(
            _probe_kernel,
            out_shape=jax.ShapeDtypeStruct((8, 128), jnp.float32),
            grid=(1,),
            in_specs=[pl.BlockSpec((8, 128), lambda i: (0, 0),
                                   pipeline_mode=pl.Buffered(1))],
            out_specs=pl.BlockSpec((8, 128), lambda i: (0, 0)),
        )
        jax.block_until_ready(fn(jnp.zeros((8, 128), jnp.float32)))
        return True
    except Exception:
        return False


class LayerOutputManager:
    """Exact Python replica of the reference LayerOutputManager."""

    def __init__(self, k):
        self.k = k
        self.outputs = []

    def add(self, output):
        if len(self.outputs) <= self.k + 1:
            self.outputs.append(output)
        else:
            if len(self.outputs) == self.k + 2:
                intermediate_sum = self.outputs[1]
            else:
                intermediate_sum = self.outputs[1] + output
            self.outputs = [self.outputs[0], intermediate_sum, *self.outputs[-self.k:]]

    def get_outputs(self):
        return self.outputs


# --------------------------- decoder-block kernel --------------------------- #

def _decoder_block_kernel(*refs, num_layers_in, x_layer_idx, num_heads,
                          batch_tile, seq_len):
    L = num_layers_in
    if x_layer_idx is None:
        x_ref, layer_refs, w0 = refs[0], refs[1:1 + L], 1 + L
    else:                                   # x is already one of the layer outputs
        layer_refs, w0 = refs[:L], L
        x_ref = layer_refs[x_layer_idx]
    (grn_w_ref, grn_b_ref, attn_w_ref, ffn_w1_ref, ffn_b1_ref,
     ffn_w2_ref, pvec_ref) = refs[w0:w0 + 7]
    out_ref = refs[w0 + 7]

    N, D = out_ref.shape                    # N = batch_tile * seq_len tokens (sublanes)
    Bt, S, H = batch_tile, seq_len, num_heads
    hd = D // H

    # packed small params (12, D) f32:
    #  0-2 grn LN gains (q,k,v) | 3-5 grn LN betas (q,k,v) | 6 attn_out bias
    #  7 attn_norm gain | 8 attn_norm bias | 9 ffn out bias | 10 ffn_norm gain
    #  11 ffn_norm bias
    pvec = pvec_ref[...]
    w_qkv = grn_w_ref[...]                  # (D, 3D) ACT_DTYPE
    b_qkv = grn_b_ref[...]                  # (1, 3D) f32

    # ---- fused GRN(q,k,v): one (D, 3D) matmul per stacked layer; the LN "hat"
    # of each stacked layer is parameter-free and shared by q/k/v:
    #   sum_l(hat_l*g + beta) == (sum_l hat_l)*g + L*beta   (exact math).
    relu_acc = jnp.zeros((N, 3 * D), jnp.float32)
    hat_sum = jnp.zeros((N, D), jnp.float32)
    for l in range(L):
        s = layer_refs[l][...]                                  # (N, D) ACT_DTYPE
        relu_acc = relu_acc + jnp.maximum(
            jnp.dot(s, w_qkv, preferred_element_type=jnp.float32) + b_qkv, 0.0)
        hat_sum = hat_sum + _ln_hat(s.astype(jnp.float32))

    Lf = float(L)
    q = relu_acc[:, 0:D]         + hat_sum * pvec[0:1] + Lf * pvec[3:4]
    k = relu_acc[:, D:2 * D]     + hat_sum * pvec[1:2] + Lf * pvec[4:5]
    v = relu_acc[:, 2 * D:3 * D] + hat_sum * pvec[2:3] + Lf * pvec[5:6]

    # ---- multi-head attention (non-causal, as in the reference).  Per-head
    # QK^T / PV ride a single-batch-dim einsum; the per-head contexts are
    # re-packed lane-dense so the output projection is ONE (N, D) x (D, D)
    # MXU contraction (full K occupancy), no per-head K=hd matmuls.
    # TODO(synk): for S >= ~1k replace the dense (Bt, S, S) logits with a
    #             flash-style online-softmax loop over K/V blocks.
    scale = hd ** (-0.5)
    q3 = (q * scale).astype(ACT_DTYPE).reshape(Bt, S, D)        # scale folded once
    k3 = k.astype(ACT_DTYPE).reshape(Bt, S, D)
    v3 = v.astype(ACT_DTYPE).reshape(Bt, S, D)

    ctx_heads = []
    for h in range(H):
        sl = slice(h * hd, (h + 1) * hd)
        logits = jnp.einsum('bqd,bkd->bqk', q3[:, :, sl], k3[:, :, sl],
                            preferred_element_type=jnp.float32)         # (Bt,S,S)
        m = jnp.max(logits, axis=-1, keepdims=True)
        e = jnp.exp(logits - m)
        p = e * pl.reciprocal(jnp.sum(e, axis=-1, keepdims=True), approx=True)
        ctx_heads.append(jnp.einsum('bqk,bkd->bqd', p.astype(ACT_DTYPE),
                                    v3[:, :, sl],
                                    preferred_element_type=jnp.float32))
    ctx = jnp.concatenate(ctx_heads, axis=-1).reshape(N, D)             # (N, D) f32
    ao = jnp.dot(ctx.astype(ACT_DTYPE), attn_w_ref[...],
                 preferred_element_type=jnp.float32) + pvec[6:7]
    h1 = x_ref[...].astype(jnp.float32) + _ln(ao, pvec[7:8], pvec[8:9])

    # ---- FFN: Linear -> exact GELU -> Linear; post-norm + residual.
    f = jnp.dot(h1.astype(ACT_DTYPE), ffn_w1_ref[...],
                preferred_element_type=jnp.float32) + ffn_b1_ref[...]
    f = 0.5 * f * (1.0 + lax.erf(f * (1.0 / math.sqrt(2.0))))
    f = jnp.dot(f.astype(ACT_DTYPE), ffn_w2_ref[...],
                preferred_element_type=jnp.float32) + pvec[9:10]
    out_ref[...] = (h1 + _ln(f, pvec[10:11], pvec[11:12])).astype(out_ref.dtype)


def _choose_batch_tile(B, S, D, L, Hm, vmem_limit):
    """Largest batch tile whose working set fits the scoped-VMEM limit.

    Prefers tiles giving >= 2 grid steps so the "parallel" batch axis can be
    sharded across TensorCores (2 TCs on v7x)."""
    wd = jnp.dtype(ACT_DTYPE).itemsize
    sub = {4: 8, 2: 16, 1: 32}.get(wd, 8)               # sublane alignment per dtype
    wbuf = 1 if _buffered_supported() else 2            # weight buffering depth
    weight_bytes = (wbuf * wd * (3 * D * D + D * D + 2 * D * Hm)   # matmul weights
                    + wbuf * 4 * (15 * D + Hm))                    # f32 biases / LN params
    budget = vmem_limit - weight_bytes - (4 << 20)      # margin for Mosaic scratch

    def fits(bt):
        n = bt * S
        act = 2 * wd * (L + 2) * n * D                  # double-buffered in/out blocks
        f32_tmp = 4 * n * (10 * D + Hm)                 # relu_acc/hat_sum/qkv/ctx/h1/ffn/out
        lo_tmp = wd * n * (5 * D + Hm)                  # low-precision MXU operand copies
        attn = 3 * bt * S * S * 4                       # per-head logits/exp/probs (f32)
        return act + f32_tmp + lo_tmp + attn <= budget

    divs = [d for d in range(B, 0, -1) if B % d == 0]
    aligned = [d for d in divs if (d * S) % sub == 0 or d == B]
    multi_step = [d for d in aligned if d < B or B == 1]
    for d in multi_step:
        if fits(d):
            return d
    for d in aligned:
        if fits(d):
            return d
    return min(aligned)                                 # best effort: smallest valid tile


def dca_decoder_block(x2, layer_outs2, p, num_heads, batch, seq_len):
    # TODO(synk): for very large D/Hm on v7x (64 MiB VMEM) the FFN/GRN weights
    #             need an Hm-tiled reduction grid axis instead of resident
    #             full-extent blocks.
    BS, D = x2.shape
    assert D % num_heads == 0, "dim must be divisible by num_heads"
    L = len(layer_outs2)
    Hm = p["ffn_w1"].shape[1]
    vmem_limit = _vmem_limit_bytes()
    Bt = _choose_batch_tile(batch, seq_len, D, L, Hm, vmem_limit)

    # Skip the duplicate HBM read of x when it is already a live layer output
    # (true for the first last_k+2 blocks).
    x_idx = None
    for idx, lo in enumerate(layer_outs2):
        if lo is x2:
            x_idx = idx
    act_inputs = list(layer_outs2) if x_idx is not None else [x2, *layer_outs2]

    tok_spec = pl.BlockSpec((Bt * seq_len, D), lambda i: (i, 0))
    wkw = {"pipeline_mode": pl.Buffered(1)} if _buffered_supported() else {}

    def wspec(shape):
        return pl.BlockSpec(shape, lambda i: (0, 0), **wkw)

    kernel = partial(_decoder_block_kernel, num_layers_in=L, x_layer_idx=x_idx,
                     num_heads=num_heads, batch_tile=Bt, seq_len=seq_len)
    return pl.pallas_call(
        kernel,
        out_shape=jax.ShapeDtypeStruct((BS, D), ACT_DTYPE),
        grid=(batch // Bt,),
        in_specs=[tok_spec] * len(act_inputs) + [
            wspec((D, 3 * D)), wspec((1, 3 * D)), wspec((D, D)),
            wspec((D, Hm)), wspec((1, Hm)), wspec((Hm, D)), wspec((12, D))],
        out_specs=tok_spec,
        compiler_params=pltpu.CompilerParams(
            dimension_semantics=("parallel",),
            vmem_limit_bytes=vmem_limit),
    )(*act_inputs, p["grn_w_qkv"], p["grn_b_qkv"], p["attn_w"],
      p["ffn_w1"], p["ffn_b1"], p["ffn_w2"], p["pvec"])


# --------------------------- output projection ------------------------------ #

def _out_proj_kernel(x_ref, w_ref, o_ref):
    # logits tile = x_tile @ emb_tile.T — contract the shared feature axis
    # directly (no transposed embedding copy in HBM).
    o_ref[...] = lax.dot_general(
        x_ref[...], w_ref[...],
        dimension_numbers=(((1,), (1,)), ((), ())),
        preferred_element_type=jnp.float32)


def out_proj(x2, emb_w, B, S, *, tm=512, tn=1024):
    """Weight-tied output projection: logits = x @ emb_w.T (no bias).

    Vocab is the OUTER grid axis, so the (V, D) embedding streams from HBM
    exactly once; only the much smaller (B*S, D) activations are re-read
    ceil(V / tn) times."""
    BS, D = x2.shape
    V = emb_w.shape[0]
    tm = BS if BS <= tm else (tm // 8) * 8
    tn = V if V <= tn else (tn // 128) * 128
    logits = pl.pallas_call(
        _out_proj_kernel,
        out_shape=jax.ShapeDtypeStruct((BS, V), jnp.float32),
        grid=(pl.cdiv(V, tn), pl.cdiv(BS, tm)),
        in_specs=[pl.BlockSpec((tm, D), lambda i, j: (j, 0)),
                  pl.BlockSpec((tn, D), lambda i, j: (i, 0))],
        out_specs=pl.BlockSpec((tm, tn), lambda i, j: (j, i)),
        compiler_params=pltpu.CompilerParams(
            dimension_semantics=("parallel", "parallel"),
            vmem_limit_bytes=_vmem_limit_bytes()),
    )(x2, emb_w)
    return logits.reshape(B, S, V)


# ------------------------------ model --------------------------------------- #

def init_params(key, vocab, dim, depth, mlp_ratio):
    std_lin = 0.02 / math.sqrt(2 * depth)
    keys = jax.random.split(key, 1 + depth)
    emb = (0.02 * jax.random.normal(keys[0], (vocab, dim), jnp.float32)).astype(ACT_DTYPE)
    Hm = mlp_ratio * dim
    ones = jnp.ones((1, dim), jnp.float32)
    zeros = jnp.zeros((1, dim), jnp.float32)
    # packed (12, dim) small-parameter slab -- row map in _decoder_block_kernel
    pvec = jnp.concatenate([
        jnp.ones((3, dim), jnp.float32),    # 0-2  grn LN gains (q,k,v)
        jnp.zeros((3, dim), jnp.float32),   # 3-5  grn LN betas (q,k,v)
        zeros, ones, zeros,                 # 6-8  attn_out bias, attn_norm gain/bias
        zeros, ones, zeros,                 # 9-11 ffn out bias, ffn_norm gain/bias
    ], axis=0)
    blocks = []
    for i in range(depth):
        ks = jax.random.split(keys[1 + i], 4)
        blocks.append(dict(
            # Linear weights stored as (in, out) so kernels compute x @ W + b;
            # q/k/v GRN projections fused along the output axis.
            grn_w_qkv=(std_lin * jax.random.normal(ks[0], (dim, 3 * dim),
                                                   jnp.float32)).astype(ACT_DTYPE),
            grn_b_qkv=jnp.zeros((1, 3 * dim), jnp.float32),
            attn_w=(std_lin * jax.random.normal(ks[1], (dim, dim),
                                                jnp.float32)).astype(ACT_DTYPE),
            ffn_w1=(std_lin * jax.random.normal(ks[2], (dim, Hm),
                                                jnp.float32)).astype(ACT_DTYPE),
            ffn_b1=jnp.zeros((1, Hm), jnp.float32),
            ffn_w2=(std_lin * jax.random.normal(ks[3], (Hm, dim),
                                                jnp.float32)).astype(ACT_DTYPE),
            pvec=pvec,
        ))
    return dict(emb=emb, blocks=blocks)


def dca_transformer_forward(token_ids, params, *, num_heads, last_k):
    emb_w = params["emb"]                               # (V, D) ACT_DTYPE
    D = emb_w.shape[1]
    B, S = token_ids.shape

    # Token embedding (gather = XLA glue) * sqrt(D) + sinusoidal PE, in f32.
    x = emb_w[token_ids].astype(jnp.float32) * math.sqrt(D)
    pos = jnp.arange(S, dtype=jnp.float32)[:, None]
    div = jnp.exp(jnp.arange(0, D, 2, dtype=jnp.float32) * (-math.log(10000.0) / D))
    pe = jnp.zeros((S, D), jnp.float32)
    pe = pe.at[:, 0::2].set(jnp.sin(pos * div))
    pe = pe.at[:, 1::2].set(jnp.cos(pos * div))
    x = x + pe[None]
    # dropout: identity (eval semantics)

    # Residual stream lives in HBM as (B*S, D) ACT_DTYPE token slabs.
    x2 = x.reshape(B * S, D).astype(ACT_DTYPE)

    mgr = LayerOutputManager(last_k)
    mgr.add(x2)
    for blk in params["blocks"]:
        x2 = dca_decoder_block(x2, mgr.get_outputs(), blk, num_heads, B, S)
        mgr.add(x2)

    return out_proj(x2, emb_w, B, S)


# ------------------------------- main --------------------------------------- #

if __name__ == "__main__":
    vocab, dim, depth = 64, 32, 2
    num_heads, mlp_ratio, last_k = 4, 4, 2
    B, S = 2, 8

    key = jax.random.PRNGKey(0)
    k_tok, k_par = jax.random.split(key)
    tokens = jax.random.randint(k_tok, (B, S), 0, vocab, dtype=jnp.int32)
    params = init_params(k_par, vocab, dim, depth, mlp_ratio)

    logits = dca_transformer_forward(tokens, params,
                                     num_heads=num_heads, last_k=last_k)
    jax.block_until_ready(logits)
    assert logits.shape == (B, S, vocab) and logits.dtype == jnp.float32
    print("KERNEL_OK")
</pallas_src>

<mosaic_0001>
module attributes {stable_mosaic.version = 11 : i64} {
  func.func @_probe_kernel(%arg0: i32, %arg1: memref<8x128xf32, #tpu.memory_space<vmem>>, %arg2: memref<8x128xf32, #tpu.memory_space<vmem>>) attributes {dimension_semantics = [#tpu.dimension_semantics<arbitrary>], iteration_bounds = array<i64: 1>, scalar_prefetch = 0 : i64, scratch_operands = 0 : i64, tpu.core_type = #tpu.core_type<tc>, window_params = [{pipeline_mode = #tpu.pipeline_mode<synchronous>, transform_indices = @transform_0, window_bounds = array<i64: 8, 128>}, {pipeline_mode = #tpu.pipeline_mode<synchronous>, transform_indices = @transform_1, window_bounds = array<i64: 8, 128>}]} {
    %c0 = arith.constant 0 : index
    %c0_0 = arith.constant 0 : index
    %0 = vector.load %arg1[%c0, %c0_0] : memref<8x128xf32, #tpu.memory_space<vmem>>, vector<8x128xf32>
    %cst = arith.constant 1.000000e+00 : f32
    %1 = vector.broadcast %cst : f32 to vector<8x128xf32>
    %2 = arith.addf %0, %1 : vector<8x128xf32>
    %c0_1 = arith.constant 0 : index
    %c0_2 = arith.constant 0 : index
    %3 = vector.load %arg2[%c0_1, %c0_2] : memref<8x128xf32, #tpu.memory_space<vmem>>, vector<8x128xf32>
    tpu.vector_store %arg2[%c0_1, %c0_2], %2 {strides = array<i32>} : memref<8x128xf32, #tpu.memory_space<vmem>>, vector<8x128xf32>,
    return
  }
  func.func @transform_0(%arg0: i32) -> (i32, i32) {
    %c0_i32 = arith.constant 0 : i32
    %c0_i32_0 = arith.constant 0 : i32
    %c0_i32_1 = arith.constant 0 : i32
    return %c0_i32, %c0_i32_0 : i32, i32
  }
  func.func @transform_1(%arg0: i32) -> (i32, i32) {
    %c0_i32 = arith.constant 0 : i32
    %c0_i32_0 = arith.constant 0 : i32
    %c0_i32_1 = arith.constant 0 : i32
    return %c0_i32, %c0_i32_0 : i32, i32
  }
}

module attributes {stable_mosaic.version = 11 : i64} {
  func.func @_decoder_block_kernel(%arg0: i32, %arg1: memref<16x32xbf16, #tpu.memory_space<vmem>>, %arg2: memref<32x96xbf16, #tpu.memory_space<vmem>>, %arg3: memref<1x96xf32, #tpu.memory_space<vmem>>, %arg4: memref<32x32xbf16, #tpu.memory_space<vmem>>, %arg5: memref<32x128xbf16, #tpu.memory_space<vmem>>, %arg6: memref<1x128xf32, #tpu.memory_space<vmem>>, %arg7: memref<128x32xbf16, #tpu.memory_space<vmem>>, %arg8: memref<12x32xf32, #tpu.memory_space<vmem>>, %arg9: memref<16x32xbf16, #tpu.memory_space<vmem>>) attributes {dimension_semantics = [#tpu.dimension_semantics<parallel>], iteration_bounds = array<i64: 1>, scalar_prefetch = 0 : i64, scratch_operands = 0 : i64, tpu.core_type = #tpu.core_type<tc>, window_params = [{transform_indices = @transform_0, window_bounds = array<i64: 16, 32>}, {pipeline_mode = #tpu.pipeline_mode<synchronous>, transform_indices = @transform_1, window_bounds = array<i64: 32, 96>}, {pipeline_mode = #tpu.pipeline_mode<synchronous>, transform_indices = @transform_2, window_bounds = array<i64: 1, 96>}, {pipeline_mode = #tpu.pipeline_mode<synchronous>, transform_indices = @transform_3, window_bounds = array<i64: 32, 32>}, {pipeline_mode = #tpu.pipeline_mode<synchronous>, transform_indices = @transform_4, window_bounds = array<i64: 32, 128>}, {pipeline_mode = #tpu.pipeline_mode<synchronous>, transform_indices = @transform_5, window_bounds = array<i64: 1, 128>}, {pipeline_mode = #tpu.pipeline_mode<synchronous>, transform_indices = @transform_6, window_bounds = array<i64: 128, 32>}, {pipeline_mode = #tpu.pipeline_mode<synchronous>, transform_indices = @transform_7, window_bounds = array<i64: 12, 32>}, {transform_indices = @transform_8, window_bounds = array<i64: 16, 32>}]} {
    %c0 = arith.constant 0 : index
    %c0_0 = arith.constant 0 : index
    %0 = vector.load %arg8[%c0, %c0_0] : memref<12x32xf32, #tpu.memory_space<vmem>>, vector<12x32xf32>
    %c0_1 = arith.constant 0 : index
    %c0_2 = arith.constant 0 : index
    %1 = vector.load %arg2[%c0_1, %c0_2] : memref<32x96xbf16, #tpu.memory_space<vmem>>, vector<32x96xbf16>
    %c0_3 = arith.constant 0 : index
    %c0_4 = arith.constant 0 : index
    %2 = vector.load %arg3[%c0_3, %c0_4] : memref<1x96xf32, #tpu.memory_space<vmem>>, vector<1x96xf32>
    %cst = arith.constant 0.000000e+00 : f32
    %3 = vector.broadcast %cst : f32 to vector<16x96xf32>
    %cst_5 = arith.constant 0.000000e+00 : f32
    %4 = vector.broadcast %cst_5 : f32 to vector<16x32xf32>
    %c0_6 = arith.constant 0 : index
    %c0_7 = arith.constant 0 : index
    %5 = vector.load %arg1[%c0_6, %c0_7] : memref<16x32xbf16, #tpu.memory_space<vmem>>, vector<16x32xbf16>
    %cst_8 = arith.constant dense<0.000000e+00> : vector<16x96xf32>
    %6 = tpu.matmul %5, %1, %cst_8 {dimension_numbers = #tpu.dot_dimension_numbers<[1], [0], [0], [1], [0, 0, 1, 1], [], []>} : vector<16x32xbf16>, vector<32x96xbf16>, vector<16x96xf32> -> vector<16x96xf32>
    %7 = vector.broadcast %2 : vector<1x96xf32> to vector<16x96xf32>
    %8 = arith.addf %6, %7 : vector<16x96xf32>
    %cst_9 = arith.constant 0.000000e+00 : f32
    %9 = vector.broadcast %cst_9 : f32 to vector<16x96xf32>
    %10 = arith.maximumf %8, %9 : vector<16x96xf32>
    %11 = arith.addf %3, %10 : vector<16x96xf32>
    %12 = arith.extf %5 : vector<16x32xbf16> to vector<16x32xf32>
    %cst_10 = arith.constant dense<0.000000e+00> : vector<16xf32>
    %13 = vector.multi_reduction <add>, %12, %cst_10 [1] : vector<16x32xf32> to vector<16xf32>
    %14 = vector.shape_cast %13 : vector<16xf32> to vector<16x1xf32>
    %cst_11 = arith.constant 3.200000e+01 : f32
    %15 = vector.broadcast %cst_11 : f32 to vector<16x1xf32>
    %16 = arith.divf %14, %15 : vector<16x1xf32>
    %17 = vector.broadcast %16 : vector<16x1xf32> to vector<16x32xf32>
    %18 = arith.subf %12, %17 : vector<16x32xf32>
    %19 = arith.mulf %18, %18 : vector<16x32xf32>
    %cst_12 = arith.constant dense<0.000000e+00> : vector<16xf32>
    %20 = vector.multi_reduction <add>, %19, %cst_12 [1] : vector<16x32xf32> to vector<16xf32>
    %21 = vector.shape_cast %20 : vector<16xf32> to vector<16x1xf32>
    %cst_13 = arith.constant 3.200000e+01 : f32
    %22 = vector.broadcast %cst_13 : f32 to vector<16x1xf32>
    %23 = arith.divf %21, %22 : vector<16x1xf32>
    %24 = vector.broadcast %16 : vector<16x1xf32> to vector<16x32xf32>
    %25 = arith.subf %12, %24 : vector<16x32xf32>
    %cst_14 = arith.constant 9.99999974E-6 : f32
    %26 = vector.broadcast %cst_14 : f32 to vector<16x1xf32>
    %27 = arith.addf %23, %26 : vector<16x1xf32>
    %28 = math.rsqrt %27 : vector<16x1xf32>
    %29 = vector.broadcast %28 : vector<16x1xf32> to vector<16x32xf32>
    %30 = arith.mulf %25, %29 : vector<16x32xf32>
    %31 = arith.addf %4, %30 : vector<16x32xf32>
    %32 = vector.extract_strided_slice %11 {offsets = [0, 0], sizes = [16, 32], strides = [1, 1]} : vector<16x96xf32> to vector<16x32xf32>
    %33 = vector.extract_strided_slice %0 {offsets = [0, 0], sizes = [1, 32], strides = [1, 1]} : vector<12x32xf32> to vector<1x32xf32>
    %34 = vector.broadcast %33 : vector<1x32xf32> to vector<16x32xf32>
    %35 = arith.mulf %31, %34 : vector<16x32xf32>
    %36 = arith.addf %32, %35 : vector<16x32xf32>
    %37 = vector.extract_strided_slice %0 {offsets = [3, 0], sizes = [1, 32], strides = [1, 1]} : vector<12x32xf32> to vector<1x32xf32>
    %cst_15 = arith.constant 1.000000e+00 : f32
    %38 = vector.broadcast %cst_15 : f32 to vector<1x32xf32>
    %39 = arith.mulf %38, %37 : vector<1x32xf32>
    %40 = vector.broadcast %39 : vector<1x32xf32> to vector<16x32xf32>
    %41 = arith.addf %36, %40 : vector<16x32xf32>
    %42 = vector.extract_strided_slice %11 {offsets = [0, 32], sizes = [16, 32], strides = [1, 1]} : vector<16x96xf32> to vector<16x32xf32>
    %43 = vector.extract_strided_slice %0 {offsets = [1, 0], sizes = [1, 32], strides = [1, 1]} : vector<12x32xf32> to vector<1x32xf32>
    %44 = vector.broadcast %43 : vector<1x32xf32> to vector<16x32xf32>
    %45 = arith.mulf %31, %44 : vector<16x32xf32>
    %46 = arith.addf %42, %45 : vector<16x32xf32>
    %47 = vector.extract_strided_slice %0 {offsets = [4, 0], sizes = [1, 32], strides = [1, 1]} : vector<12x32xf32> to vector<1x32xf32>
    %cst_16 = arith.constant 1.000000e+00 : f32
    %48 = vector.broadcast %cst_16 : f32 to vector<1x32xf32>
    %49 = arith.mulf %48, %47 : vector<1x32xf32>
    %50 = vector.broadcast %49 : vector<1x32xf32> to vector<16x32xf32>
    %51 = arith.addf %46, %50 : vector<16x32xf32>
    %52 = vector.extract_strided_slice %11 {offsets = [0, 64], sizes = [16, 32], strides = [1, 1]} : vector<16x96xf32> to vector<16x32xf32>
    %53 = vector.extract_strided_slice %0 {offsets = [2, 0], sizes = [1, 32], strides = [1, 1]} : vector<12x32xf32> to vector<1x32xf32>
    %54 = vector.broadcast %53 : vector<1x32xf32> to vector<16x32xf32>
    %55 = arith.mulf %31, %54 : vector<16x32xf32>
    %56 = arith.addf %52, %55 : vector<16x32xf32>
    %57 = vector.extract_strided_slice %0 {offsets = [5, 0], sizes = [1, 32], strides = [1, 1]} : vector<12x32xf32> to vector<1x32xf32>
    %cst_17 = arith.constant 1.000000e+00 : f32
    %58 = vector.broadcast %cst_17 : f32 to vector<1x32xf32>
    %59 = arith.mulf %58, %57 : vector<1x32xf32>
    %60 = vector.broadcast %59 : vector<1x32xf32> to vector<16x32xf32>
    %61 = arith.addf %56, %60 : vector<16x32xf32>
    %cst_18 = arith.constant 0.353553385 : f32
    %62 = vector.broadcast %cst_18 : f32 to vector<16x32xf32>
    %63 = arith.mulf %41, %62 : vector<16x32xf32>
    %64 = arith.truncf %63 : vector<16x32xf32> to vector<16x32xbf16>
    %65 = vector.shape_cast %64 : vector<16x32xbf16> to vector<2x8x32xbf16>
    %66 = arith.truncf %51 : vector<16x32xf32> to vector<16x32xbf16>
    %67 = vector.shape_cast %66 : vector<16x32xbf16> to vector<2x8x32xbf16>
    %68 = arith.truncf %61 : vector<16x32xf32> to vector<16x32xbf16>
    %69 = vector.shape_cast %68 : vector<16x32xbf16> to vector<2x8x32xbf16>
    %70 = vector.extract_strided_slice %65 {offsets = [0, 0, 0], sizes = [2, 8, 8], strides = [1, 1, 1]} : vector<2x8x32xbf16> to vector<2x8x8xbf16>
    %71 = vector.extract_strided_slice %67 {offsets = [0, 0, 0], sizes = [2, 8, 8], strides = [1, 1, 1]} : vector<2x8x32xbf16> to vector<2x8x8xbf16>
    "tpu.trace_start"() <{level = 10 : i32, message = "bqd,bkd->bqk"}> : () -> ()
    %cst_19 = arith.constant dense<0.000000e+00> : vector<2x8x8xf32>
    %72 = tpu.matmul %70, %71, %cst_19 {dimension_numbers = #tpu.dot_dimension_numbers<[2], [2], [1], [1], [0, 0, 0, 1, 1, 1], [0], [0]>} : vector<2x8x8xbf16>, vector<2x8x8xbf16>, vector<2x8x8xf32> -> vector<2x8x8xf32>
    "tpu.trace_stop"() : () -> ()
    %cst_20 = arith.constant dense<0xFF800000> : vector<2x8xf32>
    %73 = vector.multi_reduction <maximumf>, %72, %cst_20 [2] : vector<2x8x8xf32> to vector<2x8xf32>
    %74 = vector.shape_cast %73 : vector<2x8xf32> to vector<2x8x1xf32>
    %75 = vector.broadcast %74 : vector<2x8x1xf32> to vector<2x8x8xf32>
    %76 = arith.subf %72, %75 : vector<2x8x8xf32>
    %77 = math.exp %76 : vector<2x8x8xf32>
    %cst_21 = arith.constant dense<0.000000e+00> : vector<2x8xf32>
    %78 = vector.multi_reduction <add>, %77, %cst_21 [2] : vector<2x8x8xf32> to vector<2x8xf32>
    %79 = vector.shape_cast %78 : vector<2x8xf32> to vector<2x8x1xf32>
    %80 = tpu.reciprocal %79 {approx = true} : vector<2x8x1xf32> -> vector<2x8x1xf32>
    %81 = vector.broadcast %80 : vector<2x8x1xf32> to vector<2x8x8xf32>
    %82 = arith.mulf %77, %81 : vector<2x8x8xf32>
    %83 = arith.truncf %82 : vector<2x8x8xf32> to vector<2x8x8xbf16>
    %84 = vector.extract_strided_slice %69 {offsets = [0, 0, 0], sizes = [2, 8, 8], strides = [1, 1, 1]} : vector<2x8x32xbf16> to vector<2x8x8xbf16>
    "tpu.trace_start"() <{level = 10 : i32, message = "bqk,bkd->bqd"}> : () -> ()
    %cst_22 = arith.constant dense<0.000000e+00> : vector<2x8x8xf32>
    %85 = tpu.matmul %83, %84, %cst_22 {dimension_numbers = #tpu.dot_dimension_numbers<[2], [1], [1], [2], [0, 0, 0, 1, 1, 2], [0], [0]>} : vector<2x8x8xbf16>, vector<2x8x8xbf16>, vector<2x8x8xf32> -> vector<2x8x8xf32>
    "tpu.trace_stop"() : () -> ()
    %86 = vector.extract_strided_slice %65 {offsets = [0, 0, 8], sizes = [2, 8, 8], strides = [1, 1, 1]} : vector<2x8x32xbf16> to vector<2x8x8xbf16>
    %87 = vector.extract_strided_slice %67 {offsets = [0, 0, 8], sizes = [2, 8, 8], strides = [1, 1, 1]} : vector<2x8x32xbf16> to vector<2x8x8xbf16>
    "tpu.trace_start"() <{level = 10 : i32, message = "bqd,bkd->bqk"}> : () -> ()
    %cst_23 = arith.constant dense<0.000000e+00> : vector<2x8x8xf32>
    %88 = tpu.matmul %86, %87, %cst_23 {dimension_numbers = #tpu.dot_dimension_numbers<[2], [2], [1], [1], [0, 0, 0, 1, 1, 1], [0], [0]>} : vector<2x8x8xbf16>, vector<2x8x8xbf16>, vector<2x8x8xf32> -> vector<2x8x8xf32>
    "tpu.trace_stop"() : () -> ()
    %cst_24 = arith.constant dense<0xFF800000> : vector<2x8xf32>
    %89 = vector.multi_reduction <maximumf>, %88, %cst_24 [2] : vector<2x8x8xf32> to vector<2x8xf32>
    %90 = vector.shape_cast %89 : vector<2x8xf32> to vector<2x8x1xf32>
    %91 = vector.broadcast %90 : vector<2x8x1xf32> to vector<2x8x8xf32>
    %92 = arith.subf %88, %91 : vector<2x8x8xf32>
    %93 = math.exp %92 : vector<2x8x8xf32>
    %cst_25 = arith.constant dense<0.000000e+00> : vector<2x8xf32>
    %94 = vector.multi_reduction <add>, %93, %cst_25 [2] : vector<2x8x8xf32> to vector<2x8xf32>
    %95 = vector.shape_cast %94 : vector<2x8xf32> to vector<2x8x1xf32>
    %96 = tpu.reciprocal %95 {approx = true} : vector<2x8x1xf32> -> vector<2x8x1xf32>
    %97 = vector.broadcast %96 : vector<2x8x1xf32> to vector<2x8x8xf32>
    %98 = arith.mulf %93, %97 : vector<2x8x8xf32>
    %99 = arith.truncf %98 : vector<2x8x8xf32> to vector<2x8x8xbf16>
    %100 = vector.extract_strided_slice %69 {offsets = [0, 0, 8], sizes = [2, 8, 8], strides = [1, 1, 1]} : vector<2x8x32xbf16> to vector<2x8x8xbf16>
    "tpu.trace_start"() <{level = 10 : i32, message = "bqk,bkd->bqd"}> : () -> ()
    %cst_26 = arith.constant dense<0.000000e+00> : vector<2x8x8xf32>
    %101 = tpu.matmul %99, %100, %cst_26 {dimension_numbers = #tpu.dot_dimension_numbers<[2], [1], [1], [2], [0, 0, 0, 1, 1, 2], [0], [0]>} : vector<2x8x8xbf16>, vector<2x8x8xbf16>, vector<2x8x8xf32> -> vector<2x8x8xf32>
    "tpu.trace_stop"() : () -> ()
    %102 = vector.extract_strided_slice %65 {offsets = [0, 0, 16], sizes = [2, 8, 8], strides = [1, 1, 1]} : vector<2x8x32xbf16> to vector<2x8x8xbf16>
    %103 = vector.extract_strided_slice %67 {offsets = [0, 0, 16], sizes = [2, 8, 8], strides = [1, 1, 1]} : vector<2x8x32xbf16> to vector<2x8x8xbf16>
    "tpu.trace_start"() <{level = 10 : i32, message = "bqd,bkd->bqk"}> : () -> ()
    %cst_27 = arith.constant dense<0.000000e+00> : vector<2x8x8xf32>
    %104 = tpu.matmul %102, %103, %cst_27 {dimension_numbers = #tpu.dot_dimension_numbers<[2], [2], [1], [1], [0, 0, 0, 1, 1, 1], [0], [0]>} : vector<2x8x8xbf16>, vector<2x8x8xbf16>, vector<2x8x8xf32> -> vector<2x8x8xf32>
    "tpu.trace_stop"() : () -> ()
    %cst_28 = arith.constant dense<0xFF800000> : vector<2x8xf32>
    %105 = vector.multi_reduction <maximumf>, %104, %cst_28 [2] : vector<2x8x8xf32> to vector<2x8xf32>
    %106 = vector.shape_cast %105 : vector<2x8xf32> to vector<2x8x1xf32>
    %107 = vector.broadcast %106 : vector<2x8x1xf32> to vector<2x8x8xf32>
    %108 = arith.subf %104, %107 : vector<2x8x8xf32>
    %109 = math.exp %108 : vector<2x8x8xf32>
    %cst_29 = arith.constant dense<0.000000e+00> : vector<2x8xf32>
    %110 = vector.multi_reduction <add>, %109, %cst_29 [2] : vector<2x8x8xf32> to vector<2x8xf32>
    %111 = vector.shape_cast %110 : vector<2x8xf32> to vector<2x8x1xf32>
    %112 = tpu.reciprocal %111 {approx = true} : vector<2x8x1xf32> -> vector<2x8x1xf32>
    %113 = vector.broadcast %112 : vector<2x8x1xf32> to vector<2x8x8xf32>
    %114 = arith.mulf %109, %113 : vector<2x8x8xf32>
    %115 = arith.truncf %114 : vector<2x8x8xf32> to vector<2x8x8xbf16>
    %116 = vector.extract_strided_slice %69 {offsets = [0, 0, 16], sizes = [2, 8, 8], strides = [1, 1, 1]} : vector<2x8x32xbf16> to vector<2x8x8xbf16>
    "tpu.trace_start"() <{level = 10 : i32, message = "bqk,bkd->bqd"}> : () -> ()
    %cst_30 = arith.constant dense<0.000000e+00> : vector<2x8x8xf32>
    %117 = tpu.matmul %115, %116, %cst_30 {dimension_numbers = #tpu.dot_dimension_numbers<[2], [1], [1], [2], [0, 0, 0, 1, 1, 2], [0], [0]>} : vector<2x8x8xbf16>, vector<2x8x8xbf16>, vector<2x8x8xf32> -> vector<2x8x8xf32>
    "tpu.trace_stop"() : () -> ()
    %118 = vector.extract_strided_slice %65 {offsets = [0, 0, 24], sizes = [2, 8, 8], strides = [1, 1, 1]} : vector<2x8x32xbf16> to vector<2x8x8xbf16>
    %119 = vector.extract_strided_slice %67 {offsets = [0, 0, 24], sizes = [2, 8, 8], strides = [1, 1, 1]} : vector<2x8x32xbf16> to vector<2x8x8xbf16>
    "tpu.trace_start"() <{level = 10 : i32, message = "bqd,bkd->bqk"}> : () -> ()
    %cst_31 = arith.constant dense<0.000000e+00> : vector<2x8x8xf32>
    %120 = tpu.matmul %118, %119, %cst_31 {dimension_numbers = #tpu.dot_dimension_numbers<[2], [2], [1], [1], [0, 0, 0, 1, 1, 1], [0], [0]>} : vector<2x8x8xbf16>, vector<2x8x8xbf16>, vector<2x8x8xf32> -> vector<2x8x8xf32>
    "tpu.trace_stop"() : () -> ()
    %cst_32 = arith.constant dense<0xFF800000> : vector<2x8xf32>
    %121 = vector.multi_reduction <maximumf>, %120, %cst_32 [2] : vector<2x8x8xf32> to vector<2x8xf32>
    %122 = vector.shape_cast %121 : vector<2x8xf32> to vector<2x8x1xf32>
    %123 = vector.broadcast %122 : vector<2x8x1xf32> to vector<2x8x8xf32>
    %124 = arith.subf %120, %123 : vector<2x8x8xf32>
    %125 = math.exp %124 : vector<2x8x8xf32>
    %cst_33 = arith.constant dense<0.000000e+00> : vector<2x8xf32>
    %126 = vector.multi_reduction <add>, %125, %cst_33 [2] : vector<2x8x8xf32> to vector<2x8xf32>
    %127 = vector.shape_cast %126 : vector<2x8xf32> to vector<2x8x1xf32>
    %128 = tpu.reciprocal %127 {approx = true} : vector<2x8x1xf32> -> vector<2x8x1xf32>
    %129 = vector.broadcast %128 : vector<2x8x1xf32> to vector<2x8x8xf32>
    %130 = arith.mulf %125, %129 : vector<2x8x8xf32>
    %131 = arith.truncf %130 : vector<2x8x8xf32> to vector<2x8x8xbf16>
    %132 = vector.extract_strided_slice %69 {offsets = [0, 0, 24], sizes = [2, 8, 8], strides = [1, 1, 1]} : vector<2x8x32xbf16> to vector<2x8x8xbf16>
    "tpu.trace_start"() <{level = 10 : i32, message = "bqk,bkd->bqd"}> : () -> ()
    %cst_34 = arith.constant dense<0.000000e+00> : vector<2x8x8xf32>
    %133 = tpu.matmul %131, %132, %cst_34 {dimension_numbers = #tpu.dot_dimension_numbers<[2], [1], [1], [2], [0, 0, 0, 1, 1, 2], [0], [0]>} : vector<2x8x8xbf16>, vector<2x8x8xbf16>, vector<2x8x8xf32> -> vector<2x8x8xf32>
    "tpu.trace_stop"() : () -> ()
    %134 = tpu.concatenate %85, %101, %117, %133 in 2 : vector<2x8x8xf32>, vector<2x8x8xf32>, vector<2x8x8xf32>, vector<2x8x8xf32> -> vector<2x8x32xf32>
    %135 = vector.shape_cast %134 : vector<2x8x32xf32> to vector<16x32xf32>
    %136 = arith.truncf %135 : vector<16x32xf32> to vector<16x32xbf16>
    %c0_35 = arith.constant 0 : index
    %c0_36 = arith.constant 0 : index
    %137 = vector.load %arg4[%c0_35, %c0_36] : memref<32x32xbf16, #tpu.memory_space<vmem>>, vector<32x32xbf16>
    %cst_37 = arith.constant dense<0.000000e+00> : vector<16x32xf32>
    %138 = tpu.matmul %136, %137, %cst_37 {dimension_numbers = #tpu.dot_dimension_numbers<[1], [0], [0], [1], [0, 0, 1, 1], [], []>} : vector<16x32xbf16>, vector<32x32xbf16>, vector<16x32xf32> -> vector<16x32xf32>
    %139 = vector.extract_strided_slice %0 {offsets = [6, 0], sizes = [1, 32], strides = [1, 1]} : vector<12x32xf32> to vector<1x32xf32>
    %140 = vector.broadcast %139 : vector<1x32xf32> to vector<16x32xf32>
    %141 = arith.addf %138, %140 : vector<16x32xf32>
    %c0_38 = arith.constant 0 : index
    %c0_39 = arith.constant 0 : index
    %142 = vector.load %arg1[%c0_38, %c0_39] : memref<16x32xbf16, #tpu.memory_space<vmem>>, vector<16x32xbf16>
    %143 = arith.extf %142 : vector<16x32xbf16> to vector<16x32xf32>
    %144 = vector.extract_strided_slice %0 {offsets = [7, 0], sizes = [1, 32], strides = [1, 1]} : vector<12x32xf32> to vector<1x32xf32>
    %145 = vector.extract_strided_slice %0 {offsets = [8, 0], sizes = [1, 32], strides = [1, 1]} : vector<12x32xf32> to vector<1x32xf32>
    %cst_40 = arith.constant dense<0.000000e+00> : vector<16xf32>
    %146 = vector.multi_reduction <add>, %141, %cst_40 [1] : vector<16x32xf32> to vector<16xf32>
    %147 = vector.shape_cast %146 : vector<16xf32> to vector<16x1xf32>
    %cst_41 = arith.constant 3.200000e+01 : f32
    %148 = vector.broadcast %cst_41 : f32 to vector<16x1xf32>
    %149 = arith.divf %147, %148 : vector<16x1xf32>
    %150 = vector.broadcast %149 : vector<16x1xf32> to vector<16x32xf32>
    %151 = arith.subf %141, %150 : vector<16x32xf32>
    %152 = arith.mulf %151, %151 : vector<16x32xf32>
    %cst_42 = arith.constant dense<0.000000e+00> : vector<16xf32>
    %153 = vector.multi_reduction <add>, %152, %cst_42 [1] : vector<16x32xf32> to vector<16xf32>
    %154 = vector.shape_cast %153 : vector<16xf32> to vector<16x1xf32>
    %cst_43 = arith.constant 3.200000e+01 : f32
    %155 = vector.broadcast %cst_43 : f32 to vector<16x1xf32>
    %156 = arith.divf %154, %155 : vector<16x1xf32>
    %157 = vector.broadcast %149 : vector<16x1xf32> to vector<16x32xf32>
    %158 = arith.subf %141, %157 : vector<16x32xf32>
    %cst_44 = arith.constant 9.99999974E-6 : f32
    %159 = vector.broadcast %cst_44 : f32 to vector<16x1xf32>
    %160 = arith.addf %156, %159 : vector<16x1xf32>
    %161 = math.rsqrt %160 : vector<16x1xf32>
    %162 = vector.broadcast %161 : vector<16x1xf32> to vector<16x32xf32>
    %163 = arith.mulf %158, %162 : vector<16x32xf32>
    %164 = vector.broadcast %144 : vector<1x32xf32> to vector<16x32xf32>
    %165 = arith.mulf %163, %164 : vector<16x32xf32>
    %166 = vector.broadcast %145 : vector<1x32xf32> to vector<16x32xf32>
    %167 = arith.addf %165, %166 : vector<16x32xf32>
    %168 = arith.addf %143, %167 : vector<16x32xf32>
    %169 = arith.truncf %168 : vector<16x32xf32> to vector<16x32xbf16>
    %c0_45 = arith.constant 0 : index
    %c0_46 = arith.constant 0 : index
    %170 = vector.load %arg5[%c0_45, %c0_46] : memref<32x128xbf16, #tpu.memory_space<vmem>>, vector<32x128xbf16>
    %cst_47 = arith.constant dense<0.000000e+00> : vector<16x128xf32>
    %171 = tpu.matmul %169, %170, %cst_47 {dimension_numbers = #tpu.dot_dimension_numbers<[1], [0], [0], [1], [0, 0, 1, 1], [], []>} : vector<16x32xbf16>, vector<32x128xbf16>, vector<16x128xf32> -> vector<16x128xf32>
    %c0_48 = arith.constant 0 : index
    %c0_49 = arith.constant 0 : index
    %172 = vector.load %arg6[%c0_48, %c0_49] : memref<1x128xf32, #tpu.memory_space<vmem>>, vector<1x128xf32>
    %173 = vector.broadcast %172 : vector<1x128xf32> to vector<16x128xf32>
    %174 = arith.addf %171, %173 : vector<16x128xf32>
    %cst_50 = arith.constant 5.000000e-01 : f32
    %175 = vector.broadcast %cst_50 : f32 to vector<16x128xf32>
    %176 = arith.mulf %175, %174 : vector<16x128xf32>
    %cst_51 = arith.constant 0.707106769 : f32
    %177 = vector.broadcast %cst_51 : f32 to vector<16x128xf32>
    %178 = arith.mulf %174, %177 : vector<16x128xf32>
    %179 = math.erf %178 : vector<16x128xf32>
    %cst_52 = arith.constant 1.000000e+00 : f32
    %180 = vector.broadcast %cst_52 : f32 to vector<16x128xf32>
    %181 = arith.addf %180, %179 : vector<16x128xf32>
    %182 = arith.mulf %176, %181 : vector<16x128xf32>
    %183 = arith.truncf %182 : vector<16x128xf32> to vector<16x128xbf16>
    %c0_53 = arith.constant 0 : index
    %c0_54 = arith.constant 0 : index
    %184 = vector.load %arg7[%c0_53, %c0_54] : memref<128x32xbf16, #tpu.memory_space<vmem>>, vector<128x32xbf16>
    %cst_55 = arith.constant dense<0.000000e+00> : vector<16x32xf32>
    %185 = tpu.matmul %183, %184, %cst_55 {dimension_numbers = #tpu.dot_dimension_numbers<[1], [0], [0], [1], [0, 0, 1, 1], [], []>} : vector<16x128xbf16>, vector<128x32xbf16>, vector<16x32xf32> -> vector<16x32xf32>
    %186 = vector.extract_strided_slice %0 {offsets = [9, 0], sizes = [1, 32], strides = [1, 1]} : vector<12x32xf32> to vector<1x32xf32>
    %187 = vector.broadcast %186 : vector<1x32xf32> to vector<16x32xf32>
    %188 = arith.addf %185, %187 : vector<16x32xf32>
    %189 = vector.extract_strided_slice %0 {offsets = [10, 0], sizes = [1, 32], strides = [1, 1]} : vector<12x32xf32> to vector<1x32xf32>
    %190 = vector.extract_strided_slice %0 {offsets = [11, 0], sizes = [1, 32], strides = [1, 1]} : vector<12x32xf32> to vector<1x32xf32>
    %cst_56 = arith.constant dense<0.000000e+00> : vector<16xf32>
    %191 = vector.multi_reduction <add>, %188, %cst_56 [1] : vector<16x32xf32> to vector<16xf32>
    %192 = vector.shape_cast %191 : vector<16xf32> to vector<16x1xf32>
    %cst_57 = arith.constant 3.200000e+01 : f32
    %193 = vector.broadcast %cst_57 : f32 to vector<16x1xf32>
    %194 = arith.divf %192, %193 : vector<16x1xf32>
    %195 = vector.broadcast %194 : vector<16x1xf32> to vector<16x32xf32>
    %196 = arith.subf %188, %195 : vector<16x32xf32>
    %197 = arith.mulf %196, %196 : vector<16x32xf32>
    %cst_58 = arith.constant dense<0.000000e+00> : vector<16xf32>
    %198 = vector.multi_reduction <add>, %197, %cst_58 [1] : vector<16x32xf32> to vector<16xf32>
    %199 = vector.shape_cast %198 : vector<16xf32> to vector<16x1xf32>
    %cst_59 = arith.constant 3.200000e+01 : f32
    %200 = vector.broadcast %cst_59 : f32 to vector<16x1xf32>
    %201 = arith.divf %199, %200 : vector<16x1xf32>
    %202 = vector.broadcast %194 : vector<16x1xf32> to vector<16x32xf32>
    %203 = arith.subf %188, %202 : vector<16x32xf32>
    %cst_60 = arith.constant 9.99999974E-6 : f32
    %204 = vector.broadcast %cst_60 : f32 to vector<16x1xf32>
    %205 = arith.addf %201, %204 : vector<16x1xf32>
    %206 = math.rsqrt %205 : vector<16x1xf32>
    %207 = vector.broadcast %206 : vector<16x1xf32> to vector<16x32xf32>
    %208 = arith.mulf %203, %207 : vector<16x32xf32>
    %209 = vector.broadcast %189 : vector<1x32xf32> to vector<16x32xf32>
    %210 = arith.mulf %208, %209 : vector<16x32xf32>
    %211 = vector.broadcast %190 : vector<1x32xf32> to vector<16x32xf32>
    %212 = arith.addf %210, %211 : vector<16x32xf32>
    %213 = arith.addf %168, %212 : vector<16x32xf32>
    %214 = arith.truncf %213 : vector<16x32xf32> to vector<16x32xbf16>
    %c0_61 = arith.constant 0 : index
    %c0_62 = arith.constant 0 : index
    %215 = vector.load %arg9[%c0_61, %c0_62] : memref<16x32xbf16, #tpu.memory_space<vmem>>, vector<16x32xbf16>
    tpu.vector_store %arg9[%c0_61, %c0_62], %214 {strides = array<i32>} : memref<16x32xbf16, #tpu.memory_space<vmem>>, vector<16x32xbf16>,
    return
  }
  func.func @transform_0(%arg0: i32) -> (i32, i32) {
    %c0_i32 = arith.constant 0 : i32
    %c0_i32_0 = arith.constant 0 : i32
    return %arg0, %c0_i32 : i32, i32
  }
  func.func @transform_1(%arg0: i32) -> (i32, i32) {
    %c0_i32 = arith.constant 0 : i32
    %c0_i32_0 = arith.constant 0 : i32
    %c0_i32_1 = arith.constant 0 : i32
    return %c0_i32, %c0_i32_0 : i32, i32
  }
  func.func @transform_2(%arg0: i32) -> (i32, i32) {
    %c0_i32 = arith.constant 0 : i32
    %c0_i32_0 = arith.constant 0 : i32
    %c0_i32_1 = arith.constant 0 : i32
    return %c0_i32, %c0_i32_0 : i32, i32
  }
  func.func @transform_3(%arg0: i32) -> (i32, i32) {
    %c0_i32 = arith.constant 0 : i32
    %c0_i32_0 = arith.constant 0 : i32
    %c0_i32_1 = arith.constant 0 : i32
    return %c0_i32, %c0_i32_0 : i32, i32
  }
  func.func @transform_4(%arg0: i32) -> (i32, i32) {
    %c0_i32 = arith.constant 0 : i32
    %c0_i32_0 = arith.constant 0 : i32
    %c0_i32_1 = arith.constant 0 : i32
    return %c0_i32, %c0_i32_0 : i32, i32
  }
  func.func @transform_5(%arg0: i32) -> (i32, i32) {
    %c0_i32 = arith.constant 0 : i32
    %c0_i32_0 = arith.constant 0 : i32
    %c0_i32_1 = arith.constant 0 : i32
    return %c0_i32, %c0_i32_0 : i32, i32
  }
  func.func @transform_6(%arg0: i32) -> (i32, i32) {
    %c0_i32 = arith.constant 0 : i32
    %c0_i32_0 = arith.constant 0 : i32
    %c0_i32_1 = arith.constant 0 : i32
    return %c0_i32, %c0_i32_0 : i32, i32
  }
  func.func @transform_7(%arg0: i32) -> (i32, i32) {
    %c0_i32 = arith.constant 0 : i32
    %c0_i32_0 = arith.constant 0 : i32
    %c0_i32_1 = arith.constant 0 : i32
    return %c0_i32, %c0_i32_0 : i32, i32
  }
  func.func @transform_8(%arg0: i32) -> (i32, i32) {
    %c0_i32 = arith.constant 0 : i32
    %c0_i32_0 = arith.constant 0 : i32
    return %arg0, %c0_i32 : i32, i32
  }
}

</mosaic_0001>

<llo_original>
// kernel: tpu_custom_call.1
$region0: #{tpu_custom_call.1}
  #allocation0 [shape = 'u32[]', space=smem, size = 0x4, offset = 0x4, fixed_abs, tag = 'smem constant byte address 0x4 - core index']
  #allocation1 [shape = 'u32[144,128]{1,0:T(1,128)}', space=vmem, size = 0x12000, scoped, tag = 'internal scratch']
  %s0 = inlined_call_operand.hbm [shape: f32[8,128], index: 0, kind: input, shape index: {}]
  %s1 = inlined_call_operand.hbm [shape: f32[8,128], index: 1, kind: output, shape index: {}]
  %s2 = sld [smem:[#allocation0]]
  $region18: #{tpu_custom_call.1} parent=0
    _
  %s4 = ssub.s32 1, %s2
  %s5 = scalar_select 0, %s4, %s2
  $region1: #{tpu_custom_call.1} parent=0
    #allocation2 [shape = 'u8[4096]{0}', space=vmem, size = 0x1000, scoped, tag = 'input window, operand 0, single buffered']
    #allocation3 [shape = 's32[1]{0}', space=sflag, size = 0x4, scoped, tag = 'scoped memory for tpu_custom_call.1']
    #allocation4 [shape = 's32[1]{0}', space=sflag, size = 0x4, scoped, tag = 'scoped memory for tpu_custom_call.1']
    #allocation5 [shape = 'u8[4096]{0}', space=vmem, size = 0x1000, scoped, tag = 'output window, operand 0, single buffered']
    %6 = vsyncpa [#allocation3], 0
    %7 = vsyncpa [#allocation4], 0
    // Predicated region
    $region2: #{tpu_custom_call.1} parent=1 // pred_check
      _
    $region3: #{tpu_custom_call.1} parent=1 // pred_check_branch
      %9 = sbr.rel (0) target = $region5
    $region4: #{tpu_custom_call.1} parent=1 // pred_region
      %s11 = ssub.s32 128, 128
      %12 = vsyncadd [#allocation3], %s11
      %s14 = sshll.u32 [#allocation2], 4
      %s15 = int_to_ptr.vmem [resolvable:$true] %s14
      %17 = dma.hbm_to_vmem [thread:$0]  %s0, 128, %s15, [#allocation3]
    $region5: #{tpu_custom_call.1} parent=1 // pred_fallthru
      _
    // Predicated region
    $region6: #{tpu_custom_call.1} parent=1 // pred_check
      _
    $region7: #{tpu_custom_call.1} parent=1 // pred_check_branch
      %19 = sbr.rel (0) target = $region9
    $region8: #{tpu_custom_call.1} parent=1 // pred_region
      %20 = dma.done [#allocation3], 128
    $region9: #{tpu_custom_call.1} parent=1 // pred_fallthru
      _
    %v21 = vld [vmem:[#allocation2] sm:$0xff]
    %v22 = vadd.f32 %v21, 1.0
    %23 = vst [vmem:[#allocation5] sm:$0xff] %v22
    // Predicated region
    $region10: #{tpu_custom_call.1} parent=1 // pred_check
      _
    $region11: #{tpu_custom_call.1} parent=1 // pred_check_branch
      %25 = sbr.rel (0) target = $region13
    $region12: #{tpu_custom_call.1} parent=1 // pred_region
      %s27 = ssub.s32 128, 128
      %28 = vsyncadd [#allocation4], %s27
      %s30 = sshll.u32 [#allocation5], 4
      %s31 = int_to_ptr.vmem [resolvable:$true] %s30
      %33 = dma.vmem_to_hbm [thread:$0]  %s31, 128, %s1, [#allocation4]
    $region13: #{tpu_custom_call.1} parent=1 // pred_fallthru
      _
    // Predicated region
    $region14: #{tpu_custom_call.1} parent=1 // pred_check
      _
    $region15: #{tpu_custom_call.1} parent=1 // pred_check_branch
      %35 = sbr.rel (0) target = $region17
    $region16: #{tpu_custom_call.1} parent=1 // pred_region
      %36 = dma.done [#allocation4], 128
    $region17: #{tpu_custom_call.1} parent=1 // pred_fallthru
      _
    %37 = vsyncpa [#allocation3], 1
    %38 = vsyncpa [#allocation4], 1

// kernel: tpu_custom_call.1
$region0: #{tpu_custom_call.1}
  #allocation0 [shape = 'u32[]', space=smem, size = 0x4, offset = 0x4, fixed_abs, tag = 'smem constant byte address 0x4 - core index']
  #allocation1 [shape = 'u32[144,128]{1,0:T(1,128)}', space=vmem, size = 0x12000, scoped, tag = 'internal scratch']
  %s0 = inlined_call_operand.vmem [shape: bf16[16,32], index: 0, kind: input, shape index: {}]
  %s1 = inlined_call_operand.vmem [shape: bf16[32,96], index: 1, kind: input, shape index: {}]
  %s2 = inlined_call_operand.vmem [shape: f32[1,96], index: 2, kind: input, shape index: {}]
  %s3 = inlined_call_operand.vmem [shape: bf16[32,32], index: 3, kind: input, shape index: {}]
  %s4 = inlined_call_operand.vmem [shape: bf16[32,128], index: 4, kind: input, shape index: {}]
  %s5 = inlined_call_operand.vmem [shape: f32[1,128], index: 5, kind: input, shape index: {}]
  %s6 = inlined_call_operand.vmem [shape: bf16[128,32], index: 6, kind: input, shape index: {}]
  %s7 = inlined_call_operand.vmem [shape: f32[12,32], index: 7, kind: input, shape index: {}]
  %s8 = inlined_call_operand.hbm [shape: bf16[16,32], index: 8, kind: output, shape index: {}]
  %s9 = sld [smem:[#allocation0]]
  $region42: #{tpu_custom_call.1} parent=0
    _
  %s11 = ssub.s32 1, %s9
  %s12 = scalar_select 0, %s11, %s9
  $region1: #{tpu_custom_call.1} parent=0
    #allocation2 [shape = 'u8[4096]{0}', space=vmem, size = 0x1000, scoped, tag = 'output window, operand 0, single buffered']
    #allocation3 [shape = 's32[1]{0}', space=sflag, size = 0x4, scoped, tag = 'scoped memory for tpu_custom_call.1']
    %13 = vsyncpa [#allocation3], 0
    // Predicated region
    $region2: #{tpu_custom_call.1} parent=1 // pred_check
      _
    $region3: #{tpu_custom_call.1} parent=1 // pred_check_branch
      %15 = sbr.rel (0) target = $region5
    $region4: #{tpu_custom_call.1} parent=1 // pred_region
      _
    $region5: #{tpu_custom_call.1} parent=1 // pred_fallthru
      _
    // Predicated region
    $region6: #{tpu_custom_call.1} parent=1 // pred_check
      _
    $region7: #{tpu_custom_call.1} parent=1 // pred_check_branch
      %17 = sbr.rel (0) target = $region9
    $region8: #{tpu_custom_call.1} parent=1 // pred_region
      _
    $region9: #{tpu_custom_call.1} parent=1 // pred_fallthru
      _
    // Predicated region
    $region10: #{tpu_custom_call.1} parent=1 // pred_check
      _
    $region11: #{tpu_custom_call.1} parent=1 // pred_check_branch
      %19 = sbr.rel (0) target = $region13
    $region12: #{tpu_custom_call.1} parent=1 // pred_region
      _
    $region13: #{tpu_custom_call.1} parent=1 // pred_fallthru
      _
    // Predicated region
    $region14: #{tpu_custom_call.1} parent=1 // pred_check
      _
    $region15: #{tpu_custom_call.1} parent=1 // pred_check_branch
      %21 = sbr.rel (0) target = $region17
    $region16: #{tpu_custom_call.1} parent=1 // pred_region
      _
    $region17: #{tpu_custom_call.1} parent=1 // pred_fallthru
      _
    // Predicated region
    $region18: #{tpu_custom_call.1} parent=1 // pred_check
      _
    $region19: #{tpu_custom_call.1} parent=1 // pred_check_branch
      %23 = sbr.rel (0) target = $region21
    $region20: #{tpu_custom_call.1} parent=1 // pred_region
      _
    $region21: #{tpu_custom_call.1} parent=1 // pred_fallthru
      _
    // Predicated region
    $region22: #{tpu_custom_call.1} parent=1 // pred_check
      _
    $region23: #{tpu_custom_call.1} parent=1 // pred_check_branch
      %25 = sbr.rel (0) target = $region25
    $region24: #{tpu_custom_call.1} parent=1 // pred_region
      _
    $region25: #{tpu_custom_call.1} parent=1 // pred_fallthru
      _
    // Predicated region
    $region26: #{tpu_custom_call.1} parent=1 // pred_check
      _
    $region27: #{tpu_custom_call.1} parent=1 // pred_check_branch
      %27 = sbr.rel (0) target = $region29
    $region28: #{tpu_custom_call.1} parent=1 // pred_region
      _
    $region29: #{tpu_custom_call.1} parent=1 // pred_fallthru
      _
    // Predicated region
    $region30: #{tpu_custom_call.1} parent=1 // pred_check
      _
    $region31: #{tpu_custom_call.1} parent=1 // pred_check_branch
      %29 = sbr.rel (0) target = $region33
    $region32: #{tpu_custom_call.1} parent=1 // pred_region
      _
    $region33: #{tpu_custom_call.1} parent=1 // pred_fallthru
      _
    %v31 = vld [vmem:[%s7] sm:$0xff]
    %v32 = vld [vmem:[%s7 + $0x8] sm:$0xf]
    %v33 = vld [vmem:[%s1] sm:$0xf]
    %v34 = vld [vmem:[%s1 + $0x4] sm:$0xf]
    %v35 = vld [vmem:[%s1 + $0x8] sm:$0xf]
    %v36 = vld [vmem:[%s1 + $0xc] sm:$0xf]
    %v37 = vld [vmem:[%s2] sm:$0x1]
    %v38 = vld [vmem:[%s0] sm:$0xf]
    %v39 = vld [vmem:[%s0 + $0x4] sm:$0xf]
    %v41 = vlaneseq
    %v42 = vshrl.u32 %v41, 7
    %v43 = vsub.s32 0, %v42
    %v44 = vrot.slane %v37, %v43
    %v48 = vunpack.c.l.b16 %v38
    %v49 = vunpack.c.l.b16 %v39
    %v50 = vpack.c.b16 %v49, %v48
    %v55 = vunpack.c.l.b16 %v33
    %v56 = vunpack.c.l.b16 %v34
    %v57 = vunpack.c.l.b16 %v35
    %v58 = vunpack.c.l.b16 %v36
    %v59 = vpack.c.b16 %v56, %v55
    %v60 = vpack.c.b16 %v58, %v57
    %vm63 = vcmask 261120
    %v65 = vsel %vm63, %v50, 0
    %67 = vmatprep.subr.bf16.mxu0 0
    %68 = vmatpush1.bf16.msra.mxu0 %v59
    %69 = vmatprep.subr.bf16.mxu0 0
    %70 = vmatpush1.bf16.msra.mxu0 %v60
    %71 = vmatprep.subr.bf16.mxu0 0
    %72 = vmatpush1.bf16.msra.mxu0 0
    %73 = vmatprep.subr.bf16.mxu0 0
    %74 = vmatpush1.bf16.msra.mxu0 0
    %75 = vmatprep.subr.bf16.mxu0 0
    %76 = vmatpush1.bf16.msra.mxu0 0
    %77 = vmatprep.subr.bf16.mxu0 0
    %78 = vmatpush1.bf16.msra.mxu0 0
    %79 = vmatprep.subr.bf16.mxu0 0
    %80 = vmatpush1.bf16.msra.mxu0 0
    %81 = vmatprep.subr.bf16.mxu0 0
    %82 = vmatpush1.bf16.msra.mxu0 0
    %83 = vmatprep.subr.bf16.mxu0 0
    %84 = vmatpush1.bf16.msra.mxu0 0
    %85 = vmatprep.subr.bf16.mxu0 0
    %86 = vmatpush1.bf16.msra.mxu0 0
    %87 = vmatprep.subr.bf16.mxu0 0
    %88 = vmatpush1.bf16.msra.mxu0 0
    %89 = vmatprep.subr.bf16.mxu0 0
    %90 = vmatpush1.bf16.msra.mxu0 0
    %91 = vmatprep.subr.bf16.mxu0 0
    %92 = vmatpush1.bf16.msra.mxu0 0
    %93 = vmatprep.subr.bf16.mxu0 0
    %94 = vmatpush1.bf16.msra.mxu0 0
    %95 = vmatprep.subr.bf16.mxu0 0
    %96 = vmatpush1.bf16.msra.mxu0 0
    %97 = vmatprep.subr.bf16.mxu0 0
    %98 = vmatpush1.bf16.msra.mxu0 0
    %99 = vmatprep.mubr.bf16.mxu0 0
    %100 = vmatmul.mubr.bf16.gmra.mrb[0].mxu0 %v65
    %v101 = vpop.f32.mrb[0].mxu0
    %v102 = vadd.f32 %v44, %v101
    %v103 = vpop.f32.mrb[0].mxu0
    %v104 = vpop.f32.mrb[0].mxu0
    %v105 = vadd.f32 %v44, %v104
    %v106 = vpop.f32.mrb[0].mxu0
    %107 = vdwg.mxu0
    %v108 = vmax.f32 %v102, 0.0
    %v109 = vmax.f32 %v105, 0.0
    %v110 = vadd.f32 %v108, 0.0
    %v111 = vadd.f32 %v109, 0.0
    %v112 = vunpack.c.l.bf16 %v38
    %v113 = vunpack.c.l.bf16 %v39
    %v114 = vsel %vm63, %v112, 0.0
    %115 = vadd.xlane.f32.xlu0 %v114
    %v116 = vpop.xlane.xlu0 %115
    %v117 = vsel %vm63, %v113, 0.0
    %118 = vadd.xlane.f32.xlu0 %v117
    %v119 = vpop.xlane.xlu0 %118
    %v120 = vrcp.pop 32.0
    %v121 = vmul.f32 %v116, %v120
    %v122 = vmul.f32 %v119, %v120
    %v123 = vsub.f32 %v112, %v121
    %v124 = vsub.f32 %v113, %v122
    %v125 = vmul.f32 %v123, %v123
    %v126 = vmul.f32 %v124, %v124
    %v127 = vsel %vm63, %v125, 0.0
    %128 = vadd.xlane.f32.xlu0 %v127
    %v129 = vpop.xlane.xlu0 %128
    %v130 = vsel %vm63, %v126, 0.0
    %131 = vadd.xlane.f32.xlu0 %v130
    %v132 = vpop.xlane.xlu0 %131
    %v133 = vmul.f32 %v129, %v120
    %v134 = vmul.f32 %v132, %v120
    %v135 = vadd.f32 %v133, 1e-05
    %v136 = vadd.f32 %v134, 1e-05
    %v137 = vrsqrt.pop %v135
    %v138 = vrsqrt.pop %v136
    %v139 = vmul.f32 %v123, %v137
    %v140 = vmul.f32 %v124, %v138
    %v141 = vadd.f32 %v139, 0.0
    %v142 = vadd.f32 %v140, 0.0
    %v143 = vlaneseq
    %v144 = vshrl.u32 %v143, 7
    %v145 = vsub.s32 0, %v144
    %v146 = vrot.slane %v31, %v145
    %v147 = vmul.f32 %v141, %v146
    %v148 = vmul.f32 %v142, %v146
    %v149 = vadd.f32 %v110, %v147
    %v150 = vadd.f32 %v111, %v148
    %v151 = vlaneseq
    %v152 = vshrl.u32 %v151, 7
    %v153 = vsub.s32 3, %v152
    %v154 = vrot.slane %v31, %v153
    %v155 = vadd.f32 %v149, %v154
    %v156 = vadd.f32 %v150, %v154
    %v157 = vlaneseq
    %v158 = vshrl.u32 %v157, 7
    %v159 = vsub.s32 1, %v158
    %v160 = vrot.slane %v31, %v159
    %v161 = vmul.f32 %v141, %v160
    %v162 = vmul.f32 %v142, %v160
    %165 = vrot.lane.b32.xlu0 %v161, 32
    %v166 = vpop.permute.xlu0 %165
    %167 = vrot.lane.b32.xlu0 %v162, 32
    %v168 = vpop.permute.xlu0 %167
    %v171 = vadd.f32 %v110, %v166
    %v172 = vadd.f32 %v111, %v168
    %v173 = vlaneseq
    %v174 = vshrl.u32 %v173, 7
    %v175 = vsub.s32 4, %v174
    %v176 = vrot.slane %v31, %v175
    %178 = vrot.lane.b32.xlu0 %v176, 32
    %v179 = vpop.permute.xlu0 %178
    %v181 = vadd.f32 %v171, %v179
    %v182 = vadd.f32 %v172, %v179
    %v183 = vlaneseq
    %v184 = vshrl.u32 %v183, 7
    %v185 = vsub.s32 2, %v184
    %v186 = vrot.slane %v31, %v185
    %v187 = vmul.f32 %v141, %v186
    %v188 = vmul.f32 %v142, %v186
    %191 = vrot.lane.b32.xlu0 %v187, 64
    %v192 = vpop.permute.xlu0 %191
    %193 = vrot.lane.b32.xlu0 %v188, 64
    %v194 = vpop.permute.xlu0 %193
    %v197 = vadd.f32 %v110, %v192
    %v198 = vadd.f32 %v111, %v194
    %v199 = vlaneseq
    %v200 = vshrl.u32 %v199, 7
    %v201 = vsub.s32 5, %v200
    %v202 = vrot.slane %v31, %v201
    %204 = vrot.lane.b32.xlu0 %v202, 64
    %v205 = vpop.permute.xlu0 %204
    %v207 = vadd.f32 %v197, %v205
    %v208 = vadd.f32 %v198, %v205
    %v209 = vmul.f32 %v155, 0.35355338
    %v210 = vmul.f32 %v156, 0.35355338
    %v211 = vpack.c.bf16 %v210, %v209
    %v213 = vunpack.c.l.b16 %v211
    %v214 = vunpack.c.h.b16 %v211
    %v215 = vpack.c.b16 %v213, %v213
    %v216 = vpack.c.b16 %v214, %v214
    %v217 = vpack.c.bf16 %v182, %v181
    %v219 = vunpack.c.l.b16 %v217
    %v220 = vunpack.c.h.b16 %v217
    %v221 = vpack.c.bf16 %v208, %v207
    %v223 = vunpack.c.l.b16 %v221
    %v224 = vunpack.c.h.b16 %v221
    %v225 = vpack.c.b16 %v219, %v219
    %226 = vrot.lane.b32.xlu0 %v225, 96
    %v227 = vpop.permute.xlu0 %226
    %vm228 = vcmask 64512
    %v230 = vsel %vm228, %v215, 0
    %v233 = vsel %vm228, %v227, 0
    %235 = vmatprep.subr.bf16.mxu0 0
    %236 = vmatpush1.bf16.xpose.msra.mxu0 %v233
    %237 = vmatprep.subr.bf16.mxu0 0
    %238 = vmatpush1.bf16.xpose.msra.mxu0 0
    %239 = vmatprep.subr.bf16.mxu0 0
    %240 = vmatpush1.bf16.xpose.msra.mxu0 0
    %241 = vmatprep.subr.bf16.mxu0 0
    %242 = vmatpush1.bf16.xpose.msra.mxu0 0
    %243 = vmatprep.subr.bf16.mxu0 0
    %244 = vmatpush1.bf16.xpose.msra.mxu0 0
    %245 = vmatprep.subr.bf16.mxu0 0
    %246 = vmatpush1.bf16.xpose.msra.mxu0 0
    %247 = vmatprep.subr.bf16.mxu0 0
    %248 = vmatpush1.bf16.xpose.msra.mxu0 0
    %249 = vmatprep.subr.bf16.mxu0 0
    %250 = vmatpush1.bf16.xpose.msra.mxu0 0
    %251 = vmatprep.subr.bf16.mxu0 0
    %252 = vmatpush1.bf16.xpose.msra.mxu0 0
    %253 = vmatprep.subr.bf16.mxu0 0
    %254 = vmatpush1.bf16.xpose.msra.mxu0 0
    %255 = vmatprep.subr.bf16.mxu0 0
    %256 = vmatpush1.bf16.xpose.msra.mxu0 0
    %257 = vmatprep.subr.bf16.mxu0 0
    %258 = vmatpush1.bf16.xpose.msra.mxu0 0
    %259 = vmatprep.subr.bf16.mxu0 0
    %260 = vmatpush1.bf16.xpose.msra.mxu0 0
    %261 = vmatprep.subr.bf16.mxu0 0
    %262 = vmatpush1.bf16.xpose.msra.mxu0 0
    %263 = vmatprep.subr.bf16.mxu0 0
    %264 = vmatpush1.bf16.xpose.msra.mxu0 0
    %265 = vmatprep.subr.bf16.mxu0 0
    %266 = vmatpush1.bf16.xpose.msra.mxu0 0
    %267 = vmatprep.mubr.bf16.mxu0 0
    %268 = vmatmul.mubr.bf16.gmra.mrb[0].mxu0 %v230
    %v269 = vpop.f32.mrb[0].mxu0
    %v270 = vadd.f32 0.0, %v269
    %v271 = vpop.f32.mrb[0].mxu0
    %v272 = vpop.f32.mrb[0].mxu0
    %v273 = vpop.f32.mrb[0].mxu0
    %274 = vdwg.mxu0
    %v275 = vpack.c.b16 %v220, %v220
    %276 = vrot.lane.b32.xlu0 %v275, 96
    %v277 = vpop.permute.xlu0 %276
    %v279 = vsel %vm228, %v216, 0
    %v282 = vsel %vm228, %v277, 0
    %284 = vmatprep.subr.bf16.mxu0 0
    %285 = vmatpush1.bf16.xpose.msra.mxu0 %v282
    %286 = vmatprep.subr.bf16.mxu0 0
    %287 = vmatpush1.bf16.xpose.msra.mxu0 0
    %288 = vmatprep.subr.bf16.mxu0 0
    %289 = vmatpush1.bf16.xpose.msra.mxu0 0
    %290 = vmatprep.subr.bf16.mxu0 0
    %291 = vmatpush1.bf16.xpose.msra.mxu0 0
    %292 = vmatprep.subr.bf16.mxu0 0
    %293 = vmatpush1.bf16.xpose.msra.mxu0 0
    %294 = vmatprep.subr.bf16.mxu0 0
    %295 = vmatpush1.bf16.xpose.msra.mxu0 0
    %296 = vmatprep.subr.bf16.mxu0 0
    %297 = vmatpush1.bf16.xpose.msra.mxu0 0
    %298 = vmatprep.subr.bf16.mxu0 0
    %299 = vmatpush1.bf16.xpose.msra.mxu0 0
    %300 = vmatprep.subr.bf16.mxu0 0
    %301 = vmatpush1.bf16.xpose.msra.mxu0 0
    %302 = vmatprep.subr.bf16.mxu0 0
    %303 = vmatpush1.bf16.xpose.msra.mxu0 0
    %304 = vmatprep.subr.bf16.mxu0 0
    %305 = vmatpush1.bf16.xpose.msra.mxu0 0
    %306 = vmatprep.subr.bf16.mxu0 0
    %307 = vmatpush1.bf16.xpose.msra.mxu0 0
    %308 = vmatprep.subr.bf16.mxu0 0
    %309 = vmatpush1.bf16.xpose.msra.mxu0 0
    %310 = vmatprep.subr.bf16.mxu0 0
    %311 = vmatpush1.bf16.xpose.msra.mxu0 0
    %312 = vmatprep.subr.bf16.mxu0 0
    %313 = vmatpush1.bf16.xpose.msra.mxu0 0
    %314 = vmatprep.subr.bf16.mxu0 0
    %315 = vmatpush1.bf16.xpose.msra.mxu0 0
    %316 = vmatprep.mubr.bf16.mxu0 0
    %317 = vmatmul.mubr.bf16.gmra.mrb[0].mxu0 %v279
    %v318 = vpop.f32.mrb[0].mxu0
    %v319 = vadd.f32 0.0, %v318
    %v320 = vpop.f32.mrb[0].mxu0
    %v321 = vpop.f32.mrb[0].mxu0
    %v322 = vpop.f32.mrb[0].mxu0
    %323 = vdwg.mxu0
    %v324 = vsel %vm228, %v270, -inf
    %325 = vmax.xlane.f32.xlu0 %v324
    %v326 = vpop.xlane.xlu0 %325
    %v327 = vsel %vm228, %v319, -inf
    %328 = vmax.xlane.f32.xlu0 %v327
    %v329 = vpop.xlane.xlu0 %328
    %v330 = vsub.f32 %v270, %v326
    %v331 = vsub.f32 %v319, %v329
    %v332 = vmul.f32 %v330, 1.442695
    %v333 = vpow.pop %v332
    %v334 = vmul.f32 %v331, 1.442695
    %v335 = vpow.pop %v334
    %v336 = vsel %vm228, %v333, 0.0
    %337 = vadd.xlane.f32.xlu0 %v336
    %v338 = vpop.xlane.xlu0 %337
    %v339 = vsel %vm228, %v335, 0.0
    %340 = vadd.xlane.f32.xlu0 %v339
    %v341 = vpop.xlane.xlu0 %340
    %v342 = vrcp.pop %v338
    %v343 = vrcp.pop %v341
    %v344 = vmul.f32 %v333, %v342
    %v345 = vmul.f32 %v335, %v343
    %v346 = vpack.c.bf16 %v344, %v344
    %v347 = vpack.c.bf16 %v345, %v345
    %v348 = vpack.c.b16 %v223, %v223
    %349 = vrot.lane.b32.xlu0 %v348, 64
    %v350 = vpop.permute.xlu0 %349
    %v352 = vsel %vm228, %v346, 0
    %vm354 = vcmask 1043456
    %v356 = vsel %vm354, %v350, 0
    %358 = vmatprep.subr.bf16.mxu0 0
    %359 = vmatpush1.bf16.msra.mxu0 %v356
    %360 = vmatprep.subr.bf16.mxu0 0
    %361 = vmatpush1.bf16.msra.mxu0 0
    %362 = vmatprep.subr.bf16.mxu0 0
    %363 = vmatpush1.bf16.msra.mxu0 0
    %364 = vmatprep.subr.bf16.mxu0 0
    %365 = vmatpush1.bf16.msra.mxu0 0
    %366 = vmatprep.subr.bf16.mxu0 0
    %367 = vmatpush1.bf16.msra.mxu0 0
    %368 = vmatprep.subr.bf16.mxu0 0
    %369 = vmatpush1.bf16.msra.mxu0 0
    %370 = vmatprep.subr.bf16.mxu0 0
    %371 = vmatpush1.bf16.msra.mxu0 0
    %372 = vmatprep.subr.bf16.mxu0 0
    %373 = vmatpush1.bf16.msra.mxu0 0
    %374 = vmatprep.subr.bf16.mxu0 0
    %375 = vmatpush1.bf16.msra.mxu0 0
    %376 = vmatprep.subr.bf16.mxu0 0
    %377 = vmatpush1.bf16.msra.mxu0 0
    %378 = vmatprep.subr.bf16.mxu0 0
    %379 = vmatpush1.bf16.msra.mxu0 0
    %380 = vmatprep.subr.bf16.mxu0 0
    %381 = vmatpush1.bf16.msra.mxu0 0
    %382 = vmatprep.subr.bf16.mxu0 0
    %383 = vmatpush1.bf16.msra.mxu0 0
    %384 = vmatprep.subr.bf16.mxu0 0
    %385 = vmatpush1.bf16.msra.mxu0 0
    %386 = vmatprep.subr.bf16.mxu0 0
    %387 = vmatpush1.bf16.msra.mxu0 0
    %388 = vmatprep.subr.bf16.mxu0 0
    %389 = vmatpush1.bf16.msra.mxu0 0
    %390 = vmatprep.mubr.bf16.mxu0 0
    %391 = vmatmul.mubr.bf16.gmra.mrb[0].mxu0 %v352
    %v392 = vpop.f32.mrb[0].mxu0
    %v393 = vadd.f32 0.0, %v392
    %v394 = vpop.f32.mrb[0].mxu0
    %v395 = vpop.f32.mrb[0].mxu0
    %v396 = vpop.f32.mrb[0].mxu0
    %397 = vdwg.mxu0
    %v398 = vpack.c.b16 %v224, %v224
    %399 = vrot.lane.b32.xlu0 %v398, 64
    %v400 = vpop.permute.xlu0 %399
    %v402 = vsel %vm228, %v347, 0
    %v405 = vsel %vm354, %v400, 0
    %407 = vmatprep.subr.bf16.mxu0 0
    %408 = vmatpush1.bf16.msra.mxu0 %v405
    %409 = vmatprep.subr.bf16.mxu0 0
    %410 = vmatpush1.bf16.msra.mxu0 0
    %411 = vmatprep.subr.bf16.mxu0 0
    %412 = vmatpush1.bf16.msra.mxu0 0
    %413 = vmatprep.subr.bf16.mxu0 0
    %414 = vmatpush1.bf16.msra.mxu0 0
    %415 = vmatprep.subr.bf16.mxu0 0
    %416 = vmatpush1.bf16.msra.mxu0 0
    %417 = vmatprep.subr.bf16.mxu0 0
    %418 = vmatpush1.bf16.msra.mxu0 0
    %419 = vmatprep.subr.bf16.mxu0 0
    %420 = vmatpush1.bf16.msra.mxu0 0
    %421 = vmatprep.subr.bf16.mxu0 0
    %422 = vmatpush1.bf16.msra.mxu0 0
    %423 = vmatprep.subr.bf16.mxu0 0
    %424 = vmatpush1.bf16.msra.mxu0 0
    %425 = vmatprep.subr.bf16.mxu0 0
    %426 = vmatpush1.bf16.msra.mxu0 0
    %427 = vmatprep.subr.bf16.mxu0 0
    %428 = vmatpush1.bf16.msra.mxu0 0
    %429 = vmatprep.subr.bf16.mxu0 0
    %430 = vmatpush1.bf16.msra.mxu0 0
    %431 = vmatprep.subr.bf16.mxu0 0
    %432 = vmatpush1.bf16.msra.mxu0 0
    %433 = vmatprep.subr.bf16.mxu0 0
    %434 = vmatpush1.bf16.msra.mxu0 0
    %435 = vmatprep.subr.bf16.mxu0 0
    %436 = vmatpush1.bf16.msra.mxu0 0
    %437 = vmatprep.subr.bf16.mxu0 0
    %438 = vmatpush1.bf16.msra.mxu0 0
    %439 = vmatprep.mubr.bf16.mxu0 0
    %440 = vmatmul.mubr.bf16.gmra.mrb[0].mxu0 %v402
    %v441 = vpop.f32.mrb[0].mxu0
    %v442 = vadd.f32 0.0, %v441
    %v443 = vpop.f32.mrb[0].mxu0
    %v444 = vpop.f32.mrb[0].mxu0
    %v445 = vpop.f32.mrb[0].mxu0
    %446 = vdwg.mxu0
    %447 = vrot.lane.b32.xlu0 %v215, 120
    %v448 = vpop.permute.xlu0 %447
    %449 = vrot.lane.b32.xlu0 %v225, 88
    %v450 = vpop.permute.xlu0 %449
    %v452 = vsel %vm228, %v448, 0
    %v455 = vsel %vm228, %v450, 0
    %457 = vmatprep.subr.bf16.mxu0 0
    %458 = vmatpush1.bf16.xpose.msra.mxu0 %v455
    %459 = vmatprep.subr.bf16.mxu0 0
    %460 = vmatpush1.bf16.xpose.msra.mxu0 0
    %461 = vmatprep.subr.bf16.mxu0 0
    %462 = vmatpush1.bf16.xpose.msra.mxu0 0
    %463 = vmatprep.subr.bf16.mxu0 0
    %464 = vmatpush1.bf16.xpose.msra.mxu0 0
    %465 = vmatprep.subr.bf16.mxu0 0
    %466 = vmatpush1.bf16.xpose.msra.mxu0 0
    %467 = vmatprep.subr.bf16.mxu0 0
    %468 = vmatpush1.bf16.xpose.msra.mxu0 0
    %469 = vmatprep.subr.bf16.mxu0 0
    %470 = vmatpush1.bf16.xpose.msra.mxu0 0
    %471 = vmatprep.subr.bf16.mxu0 0
    %472 = vmatpush1.bf16.xpose.msra.mxu0 0
    %473 = vmatprep.subr.bf16.mxu0 0
    %474 = vmatpush1.bf16.xpose.msra.mxu0 0
    %475 = vmatprep.subr.bf16.mxu0 0
    %476 = vmatpush1.bf16.xpose.msra.mxu0 0
    %477 = vmatprep.subr.bf16.mxu0 0
    %478 = vmatpush1.bf16.xpose.msra.mxu0 0
    %479 = vmatprep.subr.bf16.mxu0 0
    %480 = vmatpush1.bf16.xpose.msra.mxu0 0
    %481 = vmatprep.subr.bf16.mxu0 0
    %482 = vmatpush1.bf16.xpose.msra.mxu0 0
    %483 = vmatprep.subr.bf16.mxu0 0
    %484 = vmatpush1.bf16.xpose.msra.mxu0 0
    %485 = vmatprep.subr.bf16.mxu0 0
    %486 = vmatpush1.bf16.xpose.msra.mxu0 0
    %487 = vmatprep.subr.bf16.mxu0 0
    %488 = vmatpush1.bf16.xpose.msra.mxu0 0
    %489 = vmatprep.mubr.bf16.mxu0 0
    %490 = vmatmul.mubr.bf16.gmra.mrb[0].mxu0 %v452
    %v491 = vpop.f32.mrb[0].mxu0
    %v492 = vadd.f32 0.0, %v491
    %v493 = vpop.f32.mrb[0].mxu0
    %v494 = vpop.f32.mrb[0].mxu0
    %v495 = vpop.f32.mrb[0].mxu0
    %496 = vdwg.mxu0
    %497 = vrot.lane.b32.xlu0 %v216, 120
    %v498 = vpop.permute.xlu0 %497
    %499 = vrot.lane.b32.xlu0 %v275, 88
    %v500 = vpop.permute.xlu0 %499
    %v502 = vsel %vm228, %v498, 0
    %v505 = vsel %vm228, %v500, 0
    %507 = vmatprep.subr.bf16.mxu0 0
    %508 = vmatpush1.bf16.xpose.msra.mxu0 %v505
    %509 = vmatprep.subr.bf16.mxu0 0
    %510 = vmatpush1.bf16.xpose.msra.mxu0 0
    %511 = vmatprep.subr.bf16.mxu0 0
    %512 = vmatpush1.bf16.xpose.msra.mxu0 0
    %513 = vmatprep.subr.bf16.mxu0 0
    %514 = vmatpush1.bf16.xpose.msra.mxu0 0
    %515 = vmatprep.subr.bf16.mxu0 0
    %516 = vmatpush1.bf16.xpose.msra.mxu0 0
    %517 = vmatprep.subr.bf16.mxu0 0
    %518 = vmatpush1.bf16.xpose.msra.mxu0 0
    %519 = vmatprep.subr.bf16.mxu0 0
    %520 = vmatpush1.bf16.xpose.msra.mxu0 0
    %521 = vmatprep.subr.bf16.mxu0 0
    %522 = vmatpush1.bf16.xpose.msra.mxu0 0
    %523 = vmatprep.subr.bf16.mxu0 0
    %524 = vmatpush1.bf16.xpose.msra.mxu0 0
    %525 = vmatprep.subr.bf16.mxu0 0
    %526 = vmatpush1.bf16.xpose.msra.mxu0 0
    %527 = vmatprep.subr.bf16.mxu0 0
    %528 = vmatpush1.bf16.xpose.msra.mxu0 0
    %529 = vmatprep.subr.bf16.mxu0 0
    %530 = vmatpush1.bf16.xpose.msra.mxu0 0
    %531 = vmatprep.subr.bf16.mxu0 0
    %532 = vmatpush1.bf16.xpose.msra.mxu0 0
    %533 = vmatprep.subr.bf16.mxu0 0
    %534 = vmatpush1.bf16.xpose.msra.mxu0 0
    %535 = vmatprep.subr.bf16.mxu0 0
    %536 = vmatpush1.bf16.xpose.msra.mxu0 0
    %537 = vmatprep.subr.bf16.mxu0 0
    %538 = vmatpush1.bf16.xpose.msra.mxu0 0
    %539 = vmatprep.mubr.bf16.mxu0 0
    %540 = vmatmul.mubr.bf16.gmra.mrb[0].mxu0 %v502
    %v541 = vpop.f32.mrb[0].mxu0
    %v542 = vadd.f32 0.0, %v541
    %v543 = vpop.f32.mrb[0].mxu0
    %v544 = vpop.f32.mrb[0].mxu0
    %v545 = vpop.f32.mrb[0].mxu0
    %546 = vdwg.mxu0
    %v547 = vsel %vm228, %v492, -inf
    %548 = vmax.xlane.f32.xlu0 %v547
    %v549 = vpop.xlane.xlu0 %548
    %v550 = vsel %vm228, %v542, -inf
    %551 = vmax.xlane.f32.xlu0 %v550
    %v552 = vpop.xlane.xlu0 %551
    %v553 = vsub.f32 %v492, %v549
    %v554 = vsub.f32 %v542, %v552
    %v555 = vmul.f32 %v553, 1.442695
    %v556 = vpow.pop %v555
    %v557 = vmul.f32 %v554, 1.442695
    %v558 = vpow.pop %v557
    %v559 = vsel %vm228, %v556, 0.0
    %560 = vadd.xlane.f32.xlu0 %v559
    %v561 = vpop.xlane.xlu0 %560
    %v562 = vsel %vm228, %v558, 0.0
    %563 = vadd.xlane.f32.xlu0 %v562
    %v564 = vpop.xlane.xlu0 %563
    %v565 = vrcp.pop %v561
    %v566 = vrcp.pop %v564
    %v567 = vmul.f32 %v556, %v565
    %v568 = vmul.f32 %v558, %v566
    %v569 = vpack.c.bf16 %v567, %v567
    %v570 = vpack.c.bf16 %v568, %v568
    %571 = vrot.lane.b32.xlu0 %v348, 56
    %v572 = vpop.permute.xlu0 %571
    %v574 = vsel %vm228, %v569, 0
    %v577 = vsel %vm354, %v572, 0
    %579 = vmatprep.subr.bf16.mxu0 0
    %580 = vmatpush1.bf16.msra.mxu0 %v577
    %581 = vmatprep.subr.bf16.mxu0 0
    %582 = vmatpush1.bf16.msra.mxu0 0
    %583 = vmatprep.subr.bf16.mxu0 0
    %584 = vmatpush1.bf16.msra.mxu0 0
    %585 = vmatprep.subr.bf16.mxu0 0
    %586 = vmatpush1.bf16.msra.mxu0 0
    %587 = vmatprep.subr.bf16.mxu0 0
    %588 = vmatpush1.bf16.msra.mxu0 0
    %589 = vmatprep.subr.bf16.mxu0 0
    %590 = vmatpush1.bf16.msra.mxu0 0
    %591 = vmatprep.subr.bf16.mxu0 0
    %592 = vmatpush1.bf16.msra.mxu0 0
    %593 = vmatprep.subr.bf16.mxu0 0
    %594 = vmatpush1.bf16.msra.mxu0 0
    %595 = vmatprep.subr.bf16.mxu0 0
    %596 = vmatpush1.bf16.msra.mxu0 0
    %597 = vmatprep.subr.bf16.mxu0 0
    %598 = vmatpush1.bf16.msra.mxu0 0
    %599 = vmatprep.subr.bf16.mxu0 0
    %600 = vmatpush1.bf16.msra.mxu0 0
    %601 = vmatprep.subr.bf16.mxu0 0
    %602 = vmatpush1.bf16.msra.mxu0 0
    %603 = vmatprep.subr.bf16.mxu0 0
    %604 = vmatpush1.bf16.msra.mxu0 0
    %605 = vmatprep.subr.bf16.mxu0 0
    %606 = vmatpush1.bf16.msra.mxu0 0
    %607 = vmatprep.subr.bf16.mxu0 0
    %608 = vmatpush1.bf16.msra.mxu0 0
    %609 = vmatprep.subr.bf16.mxu0 0
    %610 = vmatpush1.bf16.msra.mxu0 0
    %611 = vmatprep.mubr.bf16.mxu0 0
    %612 = vmatmul.mubr.bf16.gmra.mrb[0].mxu0 %v574
    %v613 = vpop.f32.mrb[0].mxu0
    %v614 = vadd.f32 0.0, %v613
    %v615 = vpop.f32.mrb[0].mxu0
    %v616 = vpop.f32.mrb[0].mxu0
    %v617 = vpop.f32.mrb[0].mxu0
    %618 = vdwg.mxu0
    %619 = vrot.lane.b32.xlu0 %v398, 56
    %v620 = vpop.permute.xlu0 %619
    %v622 = vsel %vm228, %v570, 0
    %v625 = vsel %vm354, %v620, 0
    %627 = vmatprep.subr.bf16.mxu0 0
    %628 = vmatpush1.bf16.msra.mxu0 %v625
    %629 = vmatprep.subr.bf16.mxu0 0
    %630 = vmatpush1.bf16.msra.mxu0 0
    %631 = vmatprep.subr.bf16.mxu0 0
    %632 = vmatpush1.bf16.msra.mxu0 0
    %633 = vmatprep.subr.bf16.mxu0 0
    %634 = vmatpush1.bf16.msra.mxu0 0
    %635 = vmatprep.subr.bf16.mxu0 0
    %636 = vmatpush1.bf16.msra.mxu0 0
    %637 = vmatprep.subr.bf16.mxu0 0
    %638 = vmatpush1.bf16.msra.mxu0 0
    %639 = vmatprep.subr.bf16.mxu0 0
    %640 = vmatpush1.bf16.msra.mxu0 0
    %641 = vmatprep.subr.bf16.mxu0 0
    %642 = vmatpush1.bf16.msra.mxu0 0
    %643 = vmatprep.subr.bf16.mxu0 0
    %644 = vmatpush1.bf16.msra.mxu0 0
    %645 = vmatprep.subr.bf16.mxu0 0
    %646 = vmatpush1.bf16.msra.mxu0 0
    %647 = vmatprep.subr.bf16.mxu0 0
    %648 = vmatpush1.bf16.msra.mxu0 0
    %649 = vmatprep.subr.bf16.mxu0 0
    %650 = vmatpush1.bf16.msra.mxu0 0
    %651 = vmatprep.subr.bf16.mxu0 0
    %652 = vmatpush1.bf16.msra.mxu0 0
    %653 = vmatprep.subr.bf16.mxu0 0
    %654 = vmatpush1.bf16.msra.mxu0 0
    %655 = vmatprep.subr.bf16.mxu0 0
    %656 = vmatpush1.bf16.msra.mxu0 0
    %657 = vmatprep.subr.bf16.mxu0 0
    %658 = vmatpush1.bf16.msra.mxu0 0
    %659 = vmatprep.mubr.bf16.mxu0 0
    %660 = vmatmul.mubr.bf16.gmra.mrb[0].mxu0 %v622
    %v661 = vpop.f32.mrb[0].mxu0
    %v662 = vadd.f32 0.0, %v661
    %v663 = vpop.f32.mrb[0].mxu0
    %v664 = vpop.f32.mrb[0].mxu0
    %v665 = vpop.f32.mrb[0].mxu0
    %666 = vdwg.mxu0
    %667 = vrot.lane.b32.xlu0 %v215, 112
    %v668 = vpop.permute.xlu0 %667
    %669 = vrot.lane.b32.xlu0 %v225, 80
    %v670 = vpop.permute.xlu0 %669
    %v672 = vsel %vm228, %v668, 0
    %v675 = vsel %vm228, %v670, 0
    %677 = vmatprep.subr.bf16.mxu0 0
    %678 = vmatpush1.bf16.xpose.msra.mxu0 %v675
    %679 = vmatprep.subr.bf16.mxu0 0
    %680 = vmatpush1.bf16.xpose.msra.mxu0 0
    %681 = vmatprep.subr.bf16.mxu0 0
    %682 = vmatpush1.bf16.xpose.msra.mxu0 0
    %683 = vmatprep.subr.bf16.mxu0 0
    %684 = vmatpush1.bf16.xpose.msra.mxu0 0
    %685 = vmatprep.subr.bf16.mxu0 0
    %686 = vmatpush1.bf16.xpose.msra.mxu0 0
    %687 = vmatprep.subr.bf16.mxu0 0
    %688 = vmatpush1.bf16.xpose.msra.mxu0 0
    %689 = vmatprep.subr.bf16.mxu0 0
    %690 = vmatpush1.bf16.xpose.msra.mxu0 0
    %691 = vmatprep.subr.bf16.mxu0 0
    %692 = vmatpush1.bf16.xpose.msra.mxu0 0
    %693 = vmatprep.subr.bf16.mxu0 0
    %694 = vmatpush1.bf16.xpose.msra.mxu0 0
    %695 = vmatprep.subr.bf16.mxu0 0
    %696 = vmatpush1.bf16.xpose.msra.mxu0 0
    %697 = vmatprep.subr.bf16.mxu0 0
    %698 = vmatpush1.bf16.xpose.msra.mxu0 0
    %699 = vmatprep.subr.bf16.mxu0 0
    %700 = vmatpush1.bf16.xpose.msra.mxu0 0
    %701 = vmatprep.subr.bf16.mxu0 0
    %702 = vmatpush1.bf16.xpose.msra.mxu0 0
    %703 = vmatprep.subr.bf16.mxu0 0
    %704 = vmatpush1.bf16.xpose.msra.mxu0 0
    %705 = vmatprep.subr.bf16.mxu0 0
    %706 = vmatpush1.bf16.xpose.msra.mxu0 0
    %707 = vmatprep.subr.bf16.mxu0 0
    %708 = vmatpush1.bf16.xpose.msra.mxu0 0
    %709 = vmatprep.mubr.bf16.mxu0 0
    %710 = vmatmul.mubr.bf16.gmra.mrb[0].mxu0 %v672
    %v711 = vpop.f32.mrb[0].mxu0
    %v712 = vadd.f32 0.0, %v711
    %v713 = vpop.f32.mrb[0].mxu0
    %v714 = vpop.f32.mrb[0].mxu0
    %v715 = vpop.f32.mrb[0].mxu0
    %716 = vdwg.mxu0
    %717 = vrot.lane.b32.xlu0 %v216, 112
    %v718 = vpop.permute.xlu0 %717
    %719 = vrot.lane.b32.xlu0 %v275, 80
    %v720 = vpop.permute.xlu0 %719
    %v722 = vsel %vm228, %v718, 0
    %v725 = vsel %vm228, %v720, 0
    %727 = vmatprep.subr.bf16.mxu0 0
    %728 = vmatpush1.bf16.xpose.msra.mxu0 %v725
    %729 = vmatprep.subr.bf16.mxu0 0
    %730 = vmatpush1.bf16.xpose.msra.mxu0 0
    %731 = vmatprep.subr.bf16.mxu0 0
    %732 = vmatpush1.bf16.xpose.msra.mxu0 0
    %733 = vmatprep.subr.bf16.mxu0 0
    %734 = vmatpush1.bf16.xpose.msra.mxu0 0
    %735 = vmatprep.subr.bf16.mxu0 0
    %736 = vmatpush1.bf16.xpose.msra.mxu0 0
    %737 = vmatprep.subr.bf16.mxu0 0
    %738 = vmatpush1.bf16.xpose.msra.mxu0 0
    %739 = vmatprep.subr.bf16.mxu0 0
    %740 = vmatpush1.bf16.xpose.msra.mxu0 0
    %741 = vmatprep.subr.bf16.mxu0 0
    %742 = vmatpush1.bf16.xpose.msra.mxu0 0
    %743 = vmatprep.subr.bf16.mxu0 0
    %744 = vmatpush1.bf16.xpose.msra.mxu0 0
    %745 = vmatprep.subr.bf16.mxu0 0
    %746 = vmatpush1.bf16.xpose.msra.mxu0 0
    %747 = vmatprep.subr.bf16.mxu0 0
    %748 = vmatpush1.bf16.xpose.msra.mxu0 0
    %749 = vmatprep.subr.bf16.mxu0 0
    %750 = vmatpush1.bf16.xpose.msra.mxu0 0
    %751 = vmatprep.subr.bf16.mxu0 0
    %752 = vmatpush1.bf16.xpose.msra.mxu0 0
    %753 = vmatprep.subr.bf16.mxu0 0
    %754 = vmatpush1.bf16.xpose.msra.mxu0 0
    %755 = vmatprep.subr.bf16.mxu0 0
    %756 = vmatpush1.bf16.xpose.msra.mxu0 0
    %757 = vmatprep.subr.bf16.mxu0 0
    %758 = vmatpush1.bf16.xpose.msra.mxu0 0
    %759 = vmatprep.mubr.bf16.mxu0 0
    %760 = vmatmul.mubr.bf16.gmra.mrb[0].mxu0 %v722
    %v761 = vpop.f32.mrb[0].mxu0
    %v762 = vadd.f32 0.0, %v761
    %v763 = vpop.f32.mrb[0].mxu0
    %v764 = vpop.f32.mrb[0].mxu0
    %v765 = vpop.f32.mrb[0].mxu0
    %766 = vdwg.mxu0
    %v767 = vsel %vm228, %v712, -inf
    %768 = vmax.xlane.f32.xlu0 %v767
    %v769 = vpop.xlane.xlu0 %768
    %v770 = vsel %vm228, %v762, -inf
    %771 = vmax.xlane.f32.xlu0 %v770
    %v772 = vpop.xlane.xlu0 %771
    %v773 = vsub.f32 %v712, %v769
    %v774 = vsub.f32 %v762, %v772
    %v775 = vmul.f32 %v773, 1.442695
    %v776 = vpow.pop %v775
    %v777 = vmul.f32 %v774, 1.442695
    %v778 = vpow.pop %v777
    %v779 = vsel %vm228, %v776, 0.0
    %780 = vadd.xlane.f32.xlu0 %v779
    %v781 = vpop.xlane.xlu0 %780
    %v782 = vsel %vm228, %v778, 0.0
    %783 = vadd.xlane.f32.xlu0 %v782
    %v784 = vpop.xlane.xlu0 %783
    %v785 = vrcp.pop %v781
    %v786 = vrcp.pop %v784
    %v787 = vmul.f32 %v776, %v785
    %v788 = vmul.f32 %v778, %v786
    %v789 = vpack.c.bf16 %v787, %v787
    %v790 = vpack.c.bf16 %v788, %v788
    %791 = vrot.lane.b32.xlu0 %v348, 48
    %v792 = vpop.permute.xlu0 %791
    %v794 = vsel %vm228, %v789, 0
    %v797 = vsel %vm354, %v792, 0
    %799 = vmatprep.subr.bf16.mxu0 0
    %800 = vmatpush1.bf16.msra.mxu0 %v797
    %801 = vmatprep.subr.bf16.mxu0 0
    %802 = vmatpush1.bf16.msra.mxu0 0
    %803 = vmatprep.subr.bf16.mxu0 0
    %804 = vmatpush1.bf16.msra.mxu0 0
    %805 = vmatprep.subr.bf16.mxu0 0
    %806 = vmatpush1.bf16.msra.mxu0 0
    %807 = vmatprep.subr.bf16.mxu0 0
    %808 = vmatpush1.bf16.msra.mxu0 0
    %809 = vmatprep.subr.bf16.mxu0 0
    %810 = vmatpush1.bf16.msra.mxu0 0
    %811 = vmatprep.subr.bf16.mxu0 0
    %812 = vmatpush1.bf16.msra.mxu0 0
    %813 = vmatprep.subr.bf16.mxu0 0
    %814 = vmatpush1.bf16.msra.mxu0 0
    %815 = vmatprep.subr.bf16.mxu0 0
    %816 = vmatpush1.bf16.msra.mxu0 0
    %817 = vmatprep.subr.bf16.mxu0 0
    %818 = vmatpush1.bf16.msra.mxu0 0
    %819 = vmatprep.subr.bf16.mxu0 0
    %820 = vmatpush1.bf16.msra.mxu0 0
    %821 = vmatprep.subr.bf16.mxu0 0
    %822 = vmatpush1.bf16.msra.mxu0 0
    %823 = vmatprep.subr.bf16.mxu0 0
    %824 = vmatpush1.bf16.msra.mxu0 0
    %825 = vmatprep.subr.bf16.mxu0 0
    %826 = vmatpush1.bf16.msra.mxu0 0
    %827 = vmatprep.subr.bf16.mxu0 0
    %828 = vmatpush1.bf16.msra.mxu0 0
    %829 = vmatprep.subr.bf16.mxu0 0
    %830 = vmatpush1.bf16.msra.mxu0 0
    %831 = vmatprep.mubr.bf16.mxu0 0
    %832 = vmatmul.mubr.bf16.gmra.mrb[0].mxu0 %v794
    %v833 = vpop.f32.mrb[0].mxu0
    %v834 = vadd.f32 0.0, %v833
    %v835 = vpop.f32.mrb[0].mxu0
    %v836 = vpop.f32.mrb[0].mxu0
    %v837 = vpop.f32.mrb[0].mxu0
    %838 = vdwg.mxu0
    %839 = vrot.lane.b32.xlu0 %v398, 48
    %v840 = vpop.permute.xlu0 %839
    %v842 = vsel %vm228, %v790, 0
    %v845 = vsel %vm354, %v840, 0
    %847 = vmatprep.subr.bf16.mxu0 0
    %848 = vmatpush1.bf16.msra.mxu0 %v845
    %849 = vmatprep.subr.bf16.mxu0 0
    %850 = vmatpush1.bf16.msra.mxu0 0
    %851 = vmatprep.subr.bf16.mxu0 0
    %852 = vmatpush1.bf16.msra.mxu0 0
    %853 = vmatprep.subr.bf16.mxu0 0
    %854 = vmatpush1.bf16.msra.mxu0 0
    %855 = vmatprep.subr.bf16.mxu0 0
    %856 = vmatpush1.bf16.msra.mxu0 0
    %857 = vmatprep.subr.bf16.mxu0 0
    %858 = vmatpush1.bf16.msra.mxu0 0
    %859 = vmatprep.subr.bf16.mxu0 0
    %860 = vmatpush1.bf16.msra.mxu0 0
    %861 = vmatprep.subr.bf16.mxu0 0
    %862 = vmatpush1.bf16.msra.mxu0 0
    %863 = vmatprep.subr.bf16.mxu0 0
    %864 = vmatpush1.bf16.msra.mxu0 0
    %865 = vmatprep.subr.bf16.mxu0 0
    %866 = vmatpush1.bf16.msra.mxu0 0
    %867 = vmatprep.subr.bf16.mxu0 0
    %868 = vmatpush1.bf16.msra.mxu0 0
    %869 = vmatprep.subr.bf16.mxu0 0
    %870 = vmatpush1.bf16.msra.mxu0 0
    %871 = vmatprep.subr.bf16.mxu0 0
    %872 = vmatpush1.bf16.msra.mxu0 0
    %873 = vmatprep.subr.bf16.mxu0 0
    %874 = vmatpush1.bf16.msra.mxu0 0
    %875 = vmatprep.subr.bf16.mxu0 0
    %876 = vmatpush1.bf16.msra.mxu0 0
    %877 = vmatprep.subr.bf16.mxu0 0
    %878 = vmatpush1.bf16.msra.mxu0 0
    %879 = vmatprep.mubr.bf16.mxu0 0
    %880 = vmatmul.mubr.bf16.gmra.mrb[0].mxu0 %v842
    %v881 = vpop.f32.mrb[0].mxu0
    %v882 = vadd.f32 0.0, %v881
    %v883 = vpop.f32.mrb[0].mxu0
    %v884 = vpop.f32.mrb[0].mxu0
    %v885 = vpop.f32.mrb[0].mxu0
    %886 = vdwg.mxu0
    %887 = vrot.lane.b32.xlu0 %v215, 104
    %v888 = vpop.permute.xlu0 %887
    %889 = vrot.lane.b32.xlu0 %v225, 72
    %v890 = vpop.permute.xlu0 %889
    %v892 = vsel %vm228, %v888, 0
    %v895 = vsel %vm228, %v890, 0
    %897 = vmatprep.subr.bf16.mxu0 0
    %898 = vmatpush1.bf16.xpose.msra.mxu0 %v895
    %899 = vmatprep.subr.bf16.mxu0 0
    %900 = vmatpush1.bf16.xpose.msra.mxu0 0
    %901 = vmatprep.subr.bf16.mxu0 0
    %902 = vmatpush1.bf16.xpose.msra.mxu0 0
    %903 = vmatprep.subr.bf16.mxu0 0
    %904 = vmatpush1.bf16.xpose.msra.mxu0 0
    %905 = vmatprep.subr.bf16.mxu0 0
    %906 = vmatpush1.bf16.xpose.msra.mxu0 0
    %907 = vmatprep.subr.bf16.mxu0 0
    %908 = vmatpush1.bf16.xpose.msra.mxu0 0
    %909 = vmatprep.subr.bf16.mxu0 0
    %910 = vmatpush1.bf16.xpose.msra.mxu0 0
    %911 = vmatprep.subr.bf16.mxu0 0
    %912 = vmatpush1.bf16.xpose.msra.mxu0 0
    %913 = vmatprep.subr.bf16.mxu0 0
    %914 = vmatpush1.bf16.xpose.msra.mxu0 0
    %915 = vmatprep.subr.bf16.mxu0 0
    %916 = vmatpush1.bf16.xpose.msra.mxu0 0
    %917 = vmatprep.subr.bf16.mxu0 0
    %918 = vmatpush1.bf16.xpose.msra.mxu0 0
    %919 = vmatprep.subr.bf16.mxu0 0
    %920 = vmatpush1.bf16.xpose.msra.mxu0 0
    %921 = vmatprep.subr.bf16.mxu0 0
    %922 = vmatpush1.bf16.xpose.msra.mxu0 0
    %923 = vmatprep.subr.bf16.mxu0 0
    %924 = vmatpush1.bf16.xpose.msra.mxu0 0
    %925 = vmatprep.subr.bf16.mxu0 0
    %926 = vmatpush1.bf16.xpose.msra.mxu0 0
    %927 = vmatprep.subr.bf16.mxu0 0
    %928 = vmatpush1.bf16.xpose.msra.mxu0 0
    %929 = vmatprep.mubr.bf16.mxu0 0
    %930 = vmatmul.mubr.bf16.gmra.mrb[0].mxu0 %v892
    %v931 = vpop.f32.mrb[0].mxu0
    %v932 = vadd.f32 0.0, %v931
    %v933 = vpop.f32.mrb[0].mxu0
    %v934 = vpop.f32.mrb[0].mxu0
    %v935 = vpop.f32.mrb[0].mxu0
    %936 = vdwg.mxu0
    %937 = vrot.lane.b32.xlu0 %v216, 104
    %v938 = vpop.permute.xlu0 %937
    %939 = vrot.lane.b32.xlu0 %v275, 72
    %v940 = vpop.permute.xlu0 %939
    %v942 = vsel %vm228, %v938, 0
    %v945 = vsel %vm228, %v940, 0
    %947 = vmatprep.subr.bf16.mxu0 0
    %948 = vmatpush1.bf16.xpose.msra.mxu0 %v945
    %949 = vmatprep.subr.bf16.mxu0 0
    %950 = vmatpush1.bf16.xpose.msra.mxu0 0
    %951 = vmatprep.subr.bf16.mxu0 0
    %952 = vmatpush1.bf16.xpose.msra.mxu0 0
    %953 = vmatprep.subr.bf16.mxu0 0
    %954 = vmatpush1.bf16.xpose.msra.mxu0 0
    %955 = vmatprep.subr.bf16.mxu0 0
    %956 = vmatpush1.bf16.xpose.msra.mxu0 0
    %957 = vmatprep.subr.bf16.mxu0 0
    %958 = vmatpush1.bf16.xpose.msra.mxu0 0
    %959 = vmatprep.subr.bf16.mxu0 0
    %960 = vmatpush1.bf16.xpose.msra.mxu0 0
    %961 = vmatprep.subr.bf16.mxu0 0
    %962 = vmatpush1.bf16.xpose.msra.mxu0 0
    %963 = vmatprep.subr.bf16.mxu0 0
    %964 = vmatpush1.bf16.xpose.msra.mxu0 0
    %965 = vmatprep.subr.bf16.mxu0 0
    %966 = vmatpush1.bf16.xpose.msra.mxu0 0
    %967 = vmatprep.subr.bf16.mxu0 0
    %968 = vmatpush1.bf16.xpose.msra.mxu0 0
    %969 = vmatprep.subr.bf16.mxu0 0
    %970 = vmatpush1.bf16.xpose.msra.mxu0 0
    %971 = vmatprep.subr.bf16.mxu0 0
    %972 = vmatpush1.bf16.xpose.msra.mxu0 0
    %973 = vmatprep.subr.bf16.mxu0 0
    %974 = vmatpush1.bf16.xpose.msra.mxu0 0
    %975 = vmatprep.subr.bf16.mxu0 0
    %976 = vmatpush1.bf16.xpose.msra.mxu0 0
    %977 = vmatprep.subr.bf16.mxu0 0
    %978 = vmatpush1.bf16.xpose.msra.mxu0 0
    %979 = vmatprep.mubr.bf16.mxu0 0
    %980 = vmatmul.mubr.bf16.gmra.mrb[0].mxu0 %v942
    %v981 = vpop.f32.mrb[0].mxu0
    %v982 = vadd.f32 0.0, %v981
    %v983 = vpop.f32.mrb[0].mxu0
    %v984 = vpop.f32.mrb[0].mxu0
    %v985 = vpop.f32.mrb[0].mxu0
    %986 = vdwg.mxu0
    %v987 = vsel %vm228, %v932, -inf
    %988 = vmax.xlane.f32.xlu0 %v987
    %v989 = vpop.xlane.xlu0 %988
    %v990 = vsel %vm228, %v982, -inf
    %991 = vmax.xlane.f32.xlu0 %v990
    %v992 = vpop.xlane.xlu0 %991
    %v993 = vsub.f32 %v932, %v989
    %v994 = vsub.f32 %v982, %v992
    %v995 = vmul.f32 %v993, 1.442695
    %v996 = vpow.pop %v995
    %v997 = vmul.f32 %v994, 1.442695
    %v998 = vpow.pop %v997
    %v999 = vsel %vm228, %v996, 0.0
    %1000 = vadd.xlane.f32.xlu0 %v999
    %v1001 = vpop.xlane.xlu0 %1000
    %v1002 = vsel %vm228, %v998, 0.0
    %1003 = vadd.xlane.f32.xlu0 %v1002
    %v1004 = vpop.xlane.xlu0 %1003
    %v1005 = vrcp.pop %v1001
    %v1006 = vrcp.pop %v1004
    %v1007 = vmul.f32 %v996, %v1005
    %v1008 = vmul.f32 %v998, %v1006
    %v1009 = vpack.c.bf16 %v1007, %v1007
    %v1010 = vpack.c.bf16 %v1008, %v1008
    %1011 = vrot.lane.b32.xlu0 %v348, 40
    %v1012 = vpop.permute.xlu0 %1011
    %v1014 = vsel %vm228, %v1009, 0
    %v1017 = vsel %vm354, %v1012, 0
    %1019 = vmatprep.subr.bf16.mxu0 0
    %1020 = vmatpush1.bf16.msra.mxu0 %v1017
    %1021 = vmatprep.subr.bf16.mxu0 0
    %1022 = vmatpush1.bf16.msra.mxu0 0
    %1023 = vmatprep.subr.bf16.mxu0 0
    %1024 = vmatpush1.bf16.msra.mxu0 0
    %1025 = vmatprep.subr.bf16.mxu0 0
    %1026 = vmatpush1.bf16.msra.mxu0 0
    %1027 = vmatprep.subr.bf16.mxu0 0
    %1028 = vmatpush1.bf16.msra.mxu0 0
    %1029 = vmatprep.subr.bf16.mxu0 0
    %1030 = vmatpush1.bf16.msra.mxu0 0
    %1031 = vmatprep.subr.bf16.mxu0 0
    %1032 = vmatpush1.bf16.msra.mxu0 0
    %1033 = vmatprep.subr.bf16.mxu0 0
    %1034 = vmatpush1.bf16.msra.mxu0 0
    %1035 = vmatprep.subr.bf16.mxu0 0
    %1036 = vmatpush1.bf16.msra.mxu0 0
    %1037 = vmatprep.subr.bf16.mxu0 0
    %1038 = vmatpush1.bf16.msra.mxu0 0
    %1039 = vmatprep.subr.bf16.mxu0 0
    %1040 = vmatpush1.bf16.msra.mxu0 0
    %1041 = vmatprep.subr.bf16.mxu0 0
    %1042 = vmatpush1.bf16.msra.mxu0 0
    %1043 = vmatprep.subr.bf16.mxu0 0
    %1044 = vmatpush1.bf16.msra.mxu0 0
    %1045 = vmatprep.subr.bf16.mxu0 0
    %1046 = vmatpush1.bf16.msra.mxu0 0
    %1047 = vmatprep.subr.bf16.mxu0 0
    %1048 = vmatpush1.bf16.msra.mxu0 0
    %1049 = vmatprep.subr.bf16.mxu0 0
    %1050 = vmatpush1.bf16.msra.mxu0 0
    %1051 = vmatprep.mubr.bf16.mxu0 0
    %1052 = vmatmul.mubr.bf16.gmra.mrb[0].mxu0 %v1014
    %v1053 = vpop.f32.mrb[0].mxu0
    %v1054 = vadd.f32 0.0, %v1053
    %v1055 = vpop.f32.mrb[0].mxu0
    %v1056 = vpop.f32.mrb[0].mxu0
    %v1057 = vpop.f32.mrb[0].mxu0
    %1058 = vdwg.mxu0
    %1059 = vrot.lane.b32.xlu0 %v398, 40
    %v1060 = vpop.permute.xlu0 %1059
    %v1062 = vsel %vm228, %v1010, 0
    %v1065 = vsel %vm354, %v1060, 0
    %1067 = vmatprep.subr.bf16.mxu0 0
    %1068 = vmatpush1.bf16.msra.mxu0 %v1065
    %1069 = vmatprep.subr.bf16.mxu0 0
    %1070 = vmatpush1.bf16.msra.mxu0 0
    %1071 = vmatprep.subr.bf16.mxu0 0
    %1072 = vmatpush1.bf16.msra.mxu0 0
    %1073 = vmatprep.subr.bf16.mxu0 0
    %1074 = vmatpush1.bf16.msra.mxu0 0
    %1075 = vmatprep.subr.bf16.mxu0 0
    %1076 = vmatpush1.bf16.msra.mxu0 0
    %1077 = vmatprep.subr.bf16.mxu0 0
    %1078 = vmatpush1.bf16.msra.mxu0 0
    %1079 = vmatprep.subr.bf16.mxu0 0
    %1080 = vmatpush1.bf16.msra.mxu0 0
    %1081 = vmatprep.subr.bf16.mxu0 0
    %1082 = vmatpush1.bf16.msra.mxu0 0
    %1083 = vmatprep.subr.bf16.mxu0 0
    %1084 = vmatpush1.bf16.msra.mxu0 0
    %1085 = vmatprep.subr.bf16.mxu0 0
    %1086 = vmatpush1.bf16.msra.mxu0 0
    %1087 = vmatprep.subr.bf16.mxu0 0
    %1088 = vmatpush1.bf16.msra.mxu0 0
    %1089 = vmatprep.subr.bf16.mxu0 0
    %1090 = vmatpush1.bf16.msra.mxu0 0
    %1091 = vmatprep.subr.bf16.mxu0 0
    %1092 = vmatpush1.bf16.msra.mxu0 0
    %1093 = vmatprep.subr.bf16.mxu0 0
    %1094 = vmatpush1.bf16.msra.mxu0 0
    %1095 = vmatprep.subr.bf16.mxu0 0
    %1096 = vmatpush1.bf16.msra.mxu0 0
    %1097 = vmatprep.subr.bf16.mxu0 0
    %1098 = vmatpush1.bf16.msra.mxu0 0
    %1099 = vmatprep.mubr.bf16.mxu0 0
    %1100 = vmatmul.mubr.bf16.gmra.mrb[0].mxu0 %v1062
    %v1101 = vpop.f32.mrb[0].mxu0
    %v1102 = vadd.f32 0.0, %v1101
    %v1103 = vpop.f32.mrb[0].mxu0
    %v1104 = vpop.f32.mrb[0].mxu0
    %v1105 = vpop.f32.mrb[0].mxu0
    %1106 = vdwg.mxu0
    %1109 = vrot.lane.b32.xlu0 %v614, 8
    %v1110 = vpop.permute.xlu0 %1109
    %1111 = vrot.lane.b32.xlu0 %v662, 8
    %v1112 = vpop.permute.xlu0 %1111
    %1117 = vrot.lane.b32.xlu0 %v834, 16
    %v1118 = vpop.permute.xlu0 %1117
    %1119 = vrot.lane.b32.xlu0 %v882, 16
    %v1120 = vpop.permute.xlu0 %1119
    %1125 = vrot.lane.b32.xlu0 %v1054, 24
    %v1126 = vpop.permute.xlu0 %1125
    %1127 = vrot.lane.b32.xlu0 %v1102, 24
    %v1128 = vpop.permute.xlu0 %1127
    %v1131 = vsel %vm228, %v393, %v1110
    %v1132 = vsel %vm228, %v442, %v1112
    %vm1133 = vcmask 130048
    %v1134 = vsel %vm1133, %v1131, %v1118
    %v1135 = vsel %vm1133, %v1132, %v1120
    %vm1136 = vcmask 195584
    %v1137 = vsel %vm1136, %v1134, %v1126
    %v1138 = vsel %vm1136, %v1135, %v1128
    %v1139 = vpack.c.bf16 %v1138, %v1137
    %v1140 = vld [vmem:[%s3] sm:$0xf]
    %v1141 = vld [vmem:[%s3 + $0x4] sm:$0xf]
    %v1142 = vld [vmem:[%s3 + $0x8] sm:$0xf]
    %v1143 = vld [vmem:[%s3 + $0xc] sm:$0xf]
    %v1144 = vlaneseq
    %v1145 = vshrl.u32 %v1144, 7
    %v1146 = vsub.s32 6, %v1145
    %v1147 = vrot.slane %v31, %v1146
    %v1152 = vunpack.c.l.b16 %v1140
    %v1153 = vunpack.c.l.b16 %v1141
    %v1154 = vunpack.c.l.b16 %v1142
    %v1155 = vunpack.c.l.b16 %v1143
    %v1156 = vpack.c.b16 %v1153, %v1152
    %v1157 = vpack.c.b16 %v1155, %v1154
    %v1161 = vsel %vm63, %v1139, 0
    %1163 = vmatprep.subr.bf16.mxu0 0
    %1164 = vmatpush1.bf16.msra.mxu0 %v1156
    %1165 = vmatprep.subr.bf16.mxu0 0
    %1166 = vmatpush1.bf16.msra.mxu0 %v1157
    %1167 = vmatprep.subr.bf16.mxu0 0
    %1168 = vmatpush1.bf16.msra.mxu0 0
    %1169 = vmatprep.subr.bf16.mxu0 0
    %1170 = vmatpush1.bf16.msra.mxu0 0
    %1171 = vmatprep.subr.bf16.mxu0 0
    %1172 = vmatpush1.bf16.msra.mxu0 0
    %1173 = vmatprep.subr.bf16.mxu0 0
    %1174 = vmatpush1.bf16.msra.mxu0 0
    %1175 = vmatprep.subr.bf16.mxu0 0
    %1176 = vmatpush1.bf16.msra.mxu0 0
    %1177 = vmatprep.subr.bf16.mxu0 0
    %1178 = vmatpush1.bf16.msra.mxu0 0
    %1179 = vmatprep.subr.bf16.mxu0 0
    %1180 = vmatpush1.bf16.msra.mxu0 0
    %1181 = vmatprep.subr.bf16.mxu0 0
    %1182 = vmatpush1.bf16.msra.mxu0 0
    %1183 = vmatprep.subr.bf16.mxu0 0
    %1184 = vmatpush1.bf16.msra.mxu0 0
    %1185 = vmatprep.subr.bf16.mxu0 0
    %1186 = vmatpush1.bf16.msra.mxu0 0
    %1187 = vmatprep.subr.bf16.mxu0 0
    %1188 = vmatpush1.bf16.msra.mxu0 0
    %1189 = vmatprep.subr.bf16.mxu0 0
    %1190 = vmatpush1.bf16.msra.mxu0 0
    %1191 = vmatprep.subr.bf16.mxu0 0
    %1192 = vmatpush1.bf16.msra.mxu0 0
    %1193 = vmatprep.subr.bf16.mxu0 0
    %1194 = vmatpush1.bf16.msra.mxu0 0
    %1195 = vmatprep.mubr.bf16.mxu0 0
    %1196 = vmatmul.mubr.bf16.gmra.mrb[0].mxu0 %v1161
    %v1197 = vpop.f32.mrb[0].mxu0
    %v1198 = vadd.f32 %v1147, %v1197
    %v1199 = vpop.f32.mrb[0].mxu0
    %v1200 = vpop.f32.mrb[0].mxu0
    %v1201 = vadd.f32 %v1147, %v1200
    %v1202 = vpop.f32.mrb[0].mxu0
    %1203 = vdwg.mxu0
    %v1204 = vld [vmem:[%s0] sm:$0xf]
    %v1205 = vld [vmem:[%s0 + $0x4] sm:$0xf]
    %v1206 = vunpack.c.l.bf16 %v1204
    %v1207 = vunpack.c.l.bf16 %v1205
    %v1208 = vsel %vm63, %v1198, 0.0
    %1209 = vadd.xlane.f32.xlu0 %v1208
    %v1210 = vpop.xlane.xlu0 %1209
    %v1211 = vsel %vm63, %v1201, 0.0
    %1212 = vadd.xlane.f32.xlu0 %v1211
    %v1213 = vpop.xlane.xlu0 %1212
    %v1214 = vmul.f32 %v1210, %v120
    %v1215 = vmul.f32 %v1213, %v120
    %v1216 = vsub.f32 %v1198, %v1214
    %v1217 = vsub.f32 %v1201, %v1215
    %v1218 = vmul.f32 %v1216, %v1216
    %v1219 = vmul.f32 %v1217, %v1217
    %v1220 = vsel %vm63, %v1218, 0.0
    %1221 = vadd.xlane.f32.xlu0 %v1220
    %v1222 = vpop.xlane.xlu0 %1221
    %v1223 = vsel %vm63, %v1219, 0.0
    %1224 = vadd.xlane.f32.xlu0 %v1223
    %v1225 = vpop.xlane.xlu0 %1224
    %v1226 = vmul.f32 %v1222, %v120
    %v1227 = vmul.f32 %v1225, %v120
    %v1228 = vadd.f32 %v1226, 1e-05
    %v1229 = vadd.f32 %v1227, 1e-05
    %v1230 = vrsqrt.pop %v1228
    %v1231 = vrsqrt.pop %v1229
    %v1232 = vmul.f32 %v1216, %v1230
    %v1233 = vmul.f32 %v1217, %v1231
    %v1234 = vlaneseq
    %v1235 = vshrl.u32 %v1234, 7
    %v1236 = vsub.s32 7, %v1235
    %v1237 = vrot.slane %v31, %v1236
    %v1238 = vmul.f32 %v1232, %v1237
    %v1239 = vmul.f32 %v1233, %v1237
    %v1240 = vlaneseq
    %v1241 = vshrl.u32 %v1240, 7
    %v1242 = vsub.s32 0, %v1241
    %v1243 = vrot.slane %v32, %v1242
    %v1244 = vadd.f32 %v1238, %v1243
    %v1245 = vadd.f32 %v1239, %v1243
    %v1246 = vadd.f32 %v1206, %v1244
    %v1247 = vadd.f32 %v1207, %v1245
    %v1248 = vpack.c.bf16 %v1247, %v1246
    %v1249 = vld [vmem:[%s4] sm:$0xf]
    %v1250 = vld [vmem:[%s4 + $0x4] sm:$0xf]
    %v1251 = vld [vmem:[%s4 + $0x8] sm:$0xf]
    %v1252 = vld [vmem:[%s4 + $0xc] sm:$0xf]
    %v1253 = vld [vmem:[%s5] sm:$0x1]
    %v1255 = vlaneseq
    %v1256 = vshrl.u32 %v1255, 7
    %v1257 = vsub.s32 0, %v1256
    %v1258 = vrot.slane %v1253, %v1257
    %v1264 = vunpack.c.l.b16 %v1249
    %v1265 = vunpack.c.l.b16 %v1250
    %v1266 = vunpack.c.l.b16 %v1251
    %v1267 = vunpack.c.l.b16 %v1252
    %v1268 = vpack.c.b16 %v1265, %v1264
    %v1269 = vpack.c.b16 %v1267, %v1266
    %v1273 = vsel %vm63, %v1248, 0
    %1275 = vmatprep.subr.bf16.mxu0 0
    %1276 = vmatpush1.bf16.msra.mxu0 %v1268
    %1277 = vmatprep.subr.bf16.mxu0 0
    %1278 = vmatpush1.bf16.msra.mxu0 %v1269
    %1279 = vmatprep.subr.bf16.mxu0 0
    %1280 = vmatpush1.bf16.msra.mxu0 0
    %1281 = vmatprep.subr.bf16.mxu0 0
    %1282 = vmatpush1.bf16.msra.mxu0 0
    %1283 = vmatprep.subr.bf16.mxu0 0
    %1284 = vmatpush1.bf16.msra.mxu0 0
    %1285 = vmatprep.subr.bf16.mxu0 0
    %1286 = vmatpush1.bf16.msra.mxu0 0
    %1287 = vmatprep.subr.bf16.mxu0 0
    %1288 = vmatpush1.bf16.msra.mxu0 0
    %1289 = vmatprep.subr.bf16.mxu0 0
    %1290 = vmatpush1.bf16.msra.mxu0 0
    %1291 = vmatprep.subr.bf16.mxu0 0
    %1292 = vmatpush1.bf16.msra.mxu0 0
    %1293 = vmatprep.subr.bf16.mxu0 0
    %1294 = vmatpush1.bf16.msra.mxu0 0
    %1295 = vmatprep.subr.bf16.mxu0 0
    %1296 = vmatpush1.bf16.msra.mxu0 0
    %1297 = vmatprep.subr.bf16.mxu0 0
    %1298 = vmatpush1.bf16.msra.mxu0 0
    %1299 = vmatprep.subr.bf16.mxu0 0
    %1300 = vmatpush1.bf16.msra.mxu0 0
    %1301 = vmatprep.subr.bf16.mxu0 0
    %1302 = vmatpush1.bf16.msra.mxu0 0
    %1303 = vmatprep.subr.bf16.mxu0 0
    %1304 = vmatpush1.bf16.msra.mxu0 0
    %1305 = vmatprep.subr.bf16.mxu0 0
    %1306 = vmatpush1.bf16.msra.mxu0 0
    %1307 = vmatprep.mubr.bf16.mxu0 0
    %1308 = vmatmul.mubr.bf16.gmra.mrb[0].mxu0 %v1273
    %v1309 = vpop.f32.mrb[0].mxu0
    %v1310 = vadd.f32 %v1258, %v1309
    %v1311 = vpop.f32.mrb[0].mxu0
    %v1312 = vpop.f32.mrb[0].mxu0
    %v1313 = vadd.f32 %v1258, %v1312
    %v1314 = vpop.f32.mrb[0].mxu0
    %1315 = vdwg.mxu0
    %v1316 = vmul.f32 %v1310, 0.5
    %v1317 = vmul.f32 %v1313, 0.5
    %v1318 = vmul.f32 %v1310, 0.70710677
    %v1319 = vmul.f32 %v1313, 0.70710677
    %v1320 = verf.f32.pop %v1318
    %v1321 = verf.f32.pop %v1319
    %v1322 = vadd.f32 %v1320, 1.0
    %v1323 = vadd.f32 %v1321, 1.0
    %v1324 = vmul.f32 %v1316, %v1322
    %v1325 = vmul.f32 %v1317, %v1323
    %v1326 = vpack.c.bf16 %v1325, %v1324
    %v1327 = vld [vmem:[%s6] sm:$0xf]
    %v1328 = vld [vmem:[%s6 + $0x4] sm:$0xf]
    %v1329 = vld [vmem:[%s6 + $0x8] sm:$0xf]
    %v1330 = vld [vmem:[%s6 + $0xc] sm:$0xf]
    %v1331 = vld [vmem:[%s6 + $0x10] sm:$0xf]
    %v1332 = vld [vmem:[%s6 + $0x14] sm:$0xf]
    %v1333 = vld [vmem:[%s6 + $0x18] sm:$0xf]
    %v1334 = vld [vmem:[%s6 + $0x1c] sm:$0xf]
    %v1335 = vld [vmem:[%s6 + $0x20] sm:$0xf]
    %v1336 = vld [vmem:[%s6 + $0x24] sm:$0xf]
    %v1337 = vld [vmem:[%s6 + $0x28] sm:$0xf]
    %v1338 = vld [vmem:[%s6 + $0x2c] sm:$0xf]
    %v1339 = vld [vmem:[%s6 + $0x30] sm:$0xf]
    %v1340 = vld [vmem:[%s6 + $0x34] sm:$0xf]
    %v1341 = vld [vmem:[%s6 + $0x38] sm:$0xf]
    %v1342 = vld [vmem:[%s6 + $0x3c] sm:$0xf]
    %v1343 = vlaneseq
    %v1344 = vshrl.u32 %v1343, 7
    %v1345 = vsub.s32 1, %v1344
    %v1346 = vrot.slane %v32, %v1345
    %v1363 = vunpack.c.l.b16 %v1327
    %v1364 = vunpack.c.l.b16 %v1328
    %v1365 = vunpack.c.l.b16 %v1329
    %v1366 = vunpack.c.l.b16 %v1330
    %v1367 = vunpack.c.l.b16 %v1331
    %v1368 = vunpack.c.l.b16 %v1332
    %v1369 = vunpack.c.l.b16 %v1333
    %v1370 = vunpack.c.l.b16 %v1334
    %v1371 = vunpack.c.l.b16 %v1335
    %v1372 = vunpack.c.l.b16 %v1336
    %v1373 = vunpack.c.l.b16 %v1337
    %v1374 = vunpack.c.l.b16 %v1338
    %v1375 = vunpack.c.l.b16 %v1339
    %v1376 = vunpack.c.l.b16 %v1340
    %v1377 = vunpack.c.l.b16 %v1341
    %v1378 = vunpack.c.l.b16 %v1342
    %v1379 = vpack.c.b16 %v1364, %v1363
    %v1380 = vpack.c.b16 %v1366, %v1365
    %v1381 = vpack.c.b16 %v1368, %v1367
    %v1382 = vpack.c.b16 %v1370, %v1369
    %v1383 = vpack.c.b16 %v1372, %v1371
    %v1384 = vpack.c.b16 %v1374, %v1373
    %v1385 = vpack.c.b16 %v1376, %v1375
    %v1386 = vpack.c.b16 %v1378, %v1377
    %1395 = vmatprep.subr.bf16.mxu0 0
    %1396 = vmatpush1.bf16.msra.mxu0 %v1379
    %1397 = vmatprep.subr.bf16.mxu0 0
    %1398 = vmatpush1.bf16.msra.mxu0 %v1380
    %1399 = vmatprep.subr.bf16.mxu0 0
    %1400 = vmatpush1.bf16.msra.mxu0 %v1381
    %1401 = vmatprep.subr.bf16.mxu0 0
    %1402 = vmatpush1.bf16.msra.mxu0 %v1382
    %1403 = vmatprep.subr.bf16.mxu0 0
    %1404 = vmatpush1.bf16.msra.mxu0 %v1383
    %1405 = vmatprep.subr.bf16.mxu0 0
    %1406 = vmatpush1.bf16.msra.mxu0 %v1384
    %1407 = vmatprep.subr.bf16.mxu0 0
    %1408 = vmatpush1.bf16.msra.mxu0 %v1385
    %1409 = vmatprep.subr.bf16.mxu0 0
    %1410 = vmatpush1.bf16.msra.mxu0 %v1386
    %1411 = vmatprep.subr.bf16.mxu0 0
    %1412 = vmatpush1.bf16.msra.mxu0 0
    %1413 = vmatprep.subr.bf16.mxu0 0
    %1414 = vmatpush1.bf16.msra.mxu0 0
    %1415 = vmatprep.subr.bf16.mxu0 0
    %1416 = vmatpush1.bf16.msra.mxu0 0
    %1417 = vmatprep.subr.bf16.mxu0 0
    %1418 = vmatpush1.bf16.msra.mxu0 0
    %1419 = vmatprep.subr.bf16.mxu0 0
    %1420 = vmatpush1.bf16.msra.mxu0 0
    %1421 = vmatprep.subr.bf16.mxu0 0
    %1422 = vmatpush1.bf16.msra.mxu0 0
    %1423 = vmatprep.subr.bf16.mxu0 0
    %1424 = vmatpush1.bf16.msra.mxu0 0
    %1425 = vmatprep.subr.bf16.mxu0 0
    %1426 = vmatpush1.bf16.msra.mxu0 0
    %1427 = vmatprep.mubr.bf16.mxu0 0
    %1428 = vmatmul.mubr.bf16.gmra.mrb[0].mxu0 %v1326
    %v1429 = vpop.f32.mrb[0].mxu0
    %v1430 = vadd.f32 %v1346, %v1429
    %v1431 = vpop.f32.mrb[0].mxu0
    %v1432 = vpop.f32.mrb[0].mxu0
    %v1433 = vadd.f32 %v1346, %v1432
    %v1434 = vpop.f32.mrb[0].mxu0
    %1435 = vdwg.mxu0
    %v1436 = vsel %vm63, %v1430, 0.0
    %1437 = vadd.xlane.f32.xlu0 %v1436
    %v1438 = vpop.xlane.xlu0 %1437
    %v1439 = vsel %vm63, %v1433, 0.0
    %1440 = vadd.xlane.f32.xlu0 %v1439
    %v1441 = vpop.xlane.xlu0 %1440
    %v1442 = vmul.f32 %v1438, %v120
    %v1443 = vmul.f32 %v1441, %v120
    %v1444 = vsub.f32 %v1430, %v1442
    %v1445 = vsub.f32 %v1433, %v1443
    %v1446 = vmul.f32 %v1444, %v1444
    %v1447 = vmul.f32 %v1445, %v1445
    %v1448 = vsel %vm63, %v1446, 0.0
    %1449 = vadd.xlane.f32.xlu0 %v1448
    %v1450 = vpop.xlane.xlu0 %1449
    %v1451 = vsel %vm63, %v1447, 0.0
    %1452 = vadd.xlane.f32.xlu0 %v1451
    %v1453 = vpop.xlane.xlu0 %1452
    %v1454 = vmul.f32 %v1450, %v120
    %v1455 = vmul.f32 %v1453, %v120
    %v1456 = vadd.f32 %v1454, 1e-05
    %v1457 = vadd.f32 %v1455, 1e-05
    %v1458 = vrsqrt.pop %v1456
    %v1459 = vrsqrt.pop %v1457
    %v1460 = vmul.f32 %v1444, %v1458
    %v1461 = vmul.f32 %v1445, %v1459
    %v1462 = vlaneseq
    %v1463 = vshrl.u32 %v1462, 7
    %v1464 = vsub.s32 2, %v1463
    %v1465 = vrot.slane %v32, %v1464
    %v1466 = vmul.f32 %v1460, %v1465
    %v1467 = vmul.f32 %v1461, %v1465
    %v1468 = vlaneseq
    %v1469 = vshrl.u32 %v1468, 7
    %v1470 = vsub.s32 3, %v1469
    %v1471 = vrot.slane %v32, %v1470
    %v1472 = vadd.f32 %v1466, %v1471
    %v1473 = vadd.f32 %v1467, %v1471
    %v1474 = vadd.f32 %v1246, %v1472
    %v1475 = vadd.f32 %v1247, %v1473
    %v1476 = vpack.c.bf16 %v1475, %v1474
    %v1478 = vunpack.c.l.b16 %v1476
    %v1479 = vunpack.c.h.b16 %v1476
    %v1480 = vpack.c.b16 %v1478, %v1478
    %v1481 = vpack.c.b16 %v1479, %v1479
    %vm1484 = vcmask 257024
    %1485 = vst.msk [vmem:[#allocation2] sm:$0xf] %vm1484, %v1480
    %1486 = vst.msk [vmem:[#allocation2 + $0x4] sm:$0xf] %vm1484, %v1481
    // Predicated region
    $region34: #{tpu_custom_call.1} parent=1 // pred_check
      _
    $region35: #{tpu_custom_call.1} parent=1 // pred_check_branch
      %1488 = sbr.rel (0) target = $region37
    $region36: #{tpu_custom_call.1} parent=1 // pred_region
      %s1490 = ssub.s32 128, 128
      %1491 = vsyncadd [#allocation3], %s1490
      %s1492 = sshll.u32 [#allocation2], 4
      %s1493 = int_to_ptr.vmem [resolvable:$true] %s1492
      %1498 = dma.vmem_to_hbm [thread:$0]  %s1493, 128, %s8, [#allocation3], 64, 64, 4
    $region37: #{tpu_custom_call.1} parent=1 // pred_fallthru
      _
    // Predicated region
    $region38: #{tpu_custom_call.1} parent=1 // pred_check
      _
    $region39: #{tpu_custom_call.1} parent=1 // pred_check_branch
      %1500 = sbr.rel (0) target = $region41
    $region40: #{tpu_custom_call.1} parent=1 // pred_region
      %1501 = dma.done [#allocation3], 128
    $region41: #{tpu_custom_call.1} parent=1 // pred_fallthru
      _
    %1502 = vsyncpa [#allocation3], 1

</llo_original>
